<compile_context>
chip_gen: v6e
topology: v6e:2x2x1
jax: 0.10.0
libtpu: 0.0.40
codegen_flags: <defaults>
</compile_context>

<pallas_src>
import functools

import jax
import jax.numpy as jnp
from jax.experimental import pallas as pl
from jax.experimental.pallas import tpu as pltpu

_B_TILE = 8  # batch rows (sublanes) handled per grid block


def _make_kernel(n_layers: int, T: int, H: int):
    n_in = 5 + 3 * n_layers + 2

    def kernel(*refs):
        in_refs = refs[:n_in]
        out_ref, hn_ref, cn_ref = refs[n_in], refs[n_in + 1], refs[n_in + 2]
        seq_sc = refs[n_in + 3]                      # (T*8, H) f32 scratch (inter-layer seq)

        x_ref, h0_ref, c0_ref, wpre_ref, bpre_ref = in_refs[:5]
        layer_refs = [tuple(in_refs[5 + 3 * l + i] for i in range(3)) for l in range(n_layers)]
        wfc_ref = in_refs[5 + 3 * n_layers]
        bfc_ref = in_refs[5 + 3 * n_layers + 1]

        B8 = _B_TILE
        x = x_ref[...]                               # (T, B8, D) f32, time-major
        D = x.shape[-1]

        # ---- pre_fc + relu on the whole sequence (one matmul) ------------
        xf = x.reshape(T * B8, D).astype(jnp.bfloat16)
        pre = jnp.dot(xf, wpre_ref[...], preferred_element_type=jnp.float32) + bpre_ref[...]
        cur = jnp.maximum(pre, 0.0)                  # (T*B8, 16) f32

        # lane mask selecting the "g" gate block (torch gate order i|f|g|o); hoisted
        lane = jax.lax.broadcasted_iota(jnp.int32, (B8, 4 * H), 1)
        g_mask = (lane >= 2 * H) & (lane < 3 * H)

        h = None
        for l in range(n_layers):
            wih_ref, whh_ref, b_ref = layer_refs[l]
            whh = whh_ref[...]                       # (H, 4H) bf16
            # hoisted x-side projection + fused bias: one big matmul per layer
            gx = (jnp.dot(cur.astype(jnp.bfloat16), wih_ref[...],
                          preferred_element_type=jnp.float32)
                  + b_ref[...])                      # (T*B8, 4H) f32

            h = h0_ref[l]                            # (B8, H) f32
            c = c0_ref[l]
            for t in range(T):                       # small static T -> unroll
                g = gx[t * B8:(t + 1) * B8, :] + jnp.dot(
                    h.astype(jnp.bfloat16), whh,
                    preferred_element_type=jnp.float32)           # (B8, 4H)
                sig = jax.nn.sigmoid(g)              # full-width (EUP)
                tnh = jnp.tanh(g)
                act = jnp.where(g_mask, tnh, sig)    # [sig_i | sig_f | tanh_g | sig_o]
                i_g = act[:, 0 * H:1 * H]
                f_g = act[:, 1 * H:2 * H]
                g_g = act[:, 2 * H:3 * H]
                o_g = act[:, 3 * H:4 * H]
                c = f_g * c + i_g * g_g
                h = o_g * jnp.tanh(c)
                if l + 1 < n_layers:
                    seq_sc[t * B8:(t + 1) * B8, :] = h   # sublane-aligned static write
            hn_ref[l] = h
            cn_ref[l] = c
            if l + 1 < n_layers:
                cur = seq_sc[...]                    # (T*B8, H) input to next layer

        # ---- final fc on last timestep of last layer ----------------------
        out_ref[...] = (jnp.dot(h.astype(jnp.bfloat16), wfc_ref[...],
                                preferred_element_type=jnp.float32)
                        + bfc_ref[...])

    return kernel


def lstm_predictor_forward(x, hidden, params, *, n_layers, hidden_dim, output_dim):
    """Pallas-backed forward. x: (B, T, D); hidden: (h0, c0) each (n_layers, B, H)."""
    h0, c0 = hidden
    B, T, D = x.shape
    H = hidden_dim
    O = output_dim
    L = n_layers
    B8 = _B_TILE
    B_pad = -(-B // B8) * B8
    num_blocks = B_pad // B8
    O_pad = -(-O // 128) * 128

    f32 = jnp.float32
    bf16 = jnp.bfloat16

    # ---- wrapper-side layout plumbing (time-major, batch padded to 8) -----
    xt = jnp.pad(jnp.transpose(x, (1, 0, 2)).astype(f32),
                 ((0, 0), (0, B_pad - B), (0, 0)))                 # (T, B_pad, D)
    h0p = jnp.pad(h0.astype(f32), ((0, 0), (0, B_pad - B), (0, 0)))
    c0p = jnp.pad(c0.astype(f32), ((0, 0), (0, B_pad - B), (0, 0)))

    wpre_t = params["wpre"].T.astype(bf16)                         # (D, 16)
    bpre = params["bpre"].reshape(1, -1).astype(f32)               # (1, 16)

    inputs = [xt, h0p, c0p, wpre_t, bpre]
    in_specs = [
        pl.BlockSpec((T, B8, D), lambda i: (0, i, 0)),
        pl.BlockSpec((L, B8, H), lambda i: (0, i, 0)),
        pl.BlockSpec((L, B8, H), lambda i: (0, i, 0)),
        pl.BlockSpec((D, 16), lambda i: (0, 0)),
        pl.BlockSpec((1, 16), lambda i: (0, 0)),
    ]
    in_sz = 16
    for l in range(L):
        wih_t = params[f"wih{l}"].T.astype(bf16)                   # (in, 4H)
        whh_t = params[f"whh{l}"].T.astype(bf16)                   # (H, 4H)
        b = (params[f"bih{l}"] + params[f"bhh{l}"]).reshape(1, -1).astype(f32)
        inputs += [wih_t, whh_t, b]
        in_specs += [
            pl.BlockSpec((in_sz, 4 * H), lambda i: (0, 0)),
            pl.BlockSpec((H, 4 * H), lambda i: (0, 0)),
            pl.BlockSpec((1, 4 * H), lambda i: (0, 0)),
        ]
        in_sz = H
    wfc_t = jnp.pad(params["wfc"].T.astype(bf16), ((0, 0), (0, O_pad - O)))  # (H, O_pad)
    bfc = jnp.pad(params["bfc"].reshape(1, -1).astype(f32), ((0, 0), (0, O_pad - O)))
    inputs += [wfc_t, bfc]
    in_specs += [
        pl.BlockSpec((H, O_pad), lambda i: (0, 0)),
        pl.BlockSpec((1, O_pad), lambda i: (0, 0)),
    ]

    out_shape = (
        jax.ShapeDtypeStruct((B_pad, O_pad), f32),
        jax.ShapeDtypeStruct((L, B_pad, H), f32),
        jax.ShapeDtypeStruct((L, B_pad, H), f32),
    )
    out_specs = (
        pl.BlockSpec((B8, O_pad), lambda i: (i, 0)),
        pl.BlockSpec((L, B8, H), lambda i: (0, i, 0)),
        pl.BlockSpec((L, B8, H), lambda i: (0, i, 0)),
    )

    # ---- advisory cost estimate (helps XLA scheduling around the call) ----
    flops = 2 * T * B_pad * D * 16 + 2 * B_pad * H * O_pad
    trans = 0
    isz = 16
    for _ in range(L):
        flops += 2 * T * B_pad * (isz + H) * 4 * H
        trans += T * B_pad * (8 * H + H)
        isz = H
    bytes_accessed = sum(a.size * a.dtype.itemsize for a in inputs)
    bytes_accessed += (B_pad * O_pad + 2 * L * B_pad * H) * 4

    kernel = _make_kernel(L, T, H)
    out, h_n, c_n = pl.pallas_call(
        kernel,
        grid=(num_blocks,),
        in_specs=in_specs,
        out_specs=out_specs,
        out_shape=out_shape,
        scratch_shapes=[pltpu.VMEM((T * B8, H), f32)],
        compiler_params=pltpu.CompilerParams(dimension_semantics=("parallel",)),
        cost_estimate=pl.CostEstimate(
            flops=flops, transcendentals=trans, bytes_accessed=bytes_accessed),
    )(*inputs)

    return out[:B, :O], (h_n[:, :B, :], c_n[:, :B, :])


def _reference_forward(x, hidden, params, *, n_layers, hidden_dim):
    """Pure-JAX f32 reference mirroring torch semantics (for verification)."""
    h0, c0 = hidden
    H = hidden_dim
    seq = jnp.maximum(jnp.einsum("btd,kd->btk", x, params["wpre"]) + params["bpre"], 0.0)
    hs, cs = [], []
    for l in range(n_layers):
        wih, whh = params[f"wih{l}"], params[f"whh{l}"]
        bih, bhh = params[f"bih{l}"], params[f"bhh{l}"]
        h, c = h0[l], c0[l]
        outs = []
        for t in range(seq.shape[1]):
            g = seq[:, t, :] @ wih.T + h @ whh.T + bih + bhh
            i_g = jax.nn.sigmoid(g[:, 0 * H:1 * H])
            f_g = jax.nn.sigmoid(g[:, 1 * H:2 * H])
            g_g = jnp.tanh(g[:, 2 * H:3 * H])
            o_g = jax.nn.sigmoid(g[:, 3 * H:4 * H])
            c = f_g * c + i_g * g_g
            h = o_g * jnp.tanh(c)
            outs.append(h)
        seq = jnp.stack(outs, axis=1)
        hs.append(h)
        cs.append(c)
    out = seq[:, -1, :] @ params["wfc"].T + params["bfc"]
    return out, (jnp.stack(hs), jnp.stack(cs))


def _init_params(key, input_dim, hidden_dim, output_dim, n_layers):
    """Deterministic torch-style uniform(-1/sqrt(fan), 1/sqrt(fan)) init."""
    params = {}
    keys = jax.random.split(key, 4 + 4 * n_layers + 2)
    ki = iter(range(len(keys)))

    def u(k, shape, fan):
        bound = 1.0 / jnp.sqrt(jnp.float32(fan))
        return jax.random.uniform(k, shape, jnp.float32, -bound, bound)

    params["wpre"] = u(keys[next(ki)], (16, input_dim), input_dim)
    params["bpre"] = u(keys[next(ki)], (16,), input_dim)
    for l in range(n_layers):
        in_sz = 16 if l == 0 else hidden_dim
        params[f"wih{l}"] = u(keys[next(ki)], (4 * hidden_dim, in_sz), hidden_dim)
        params[f"whh{l}"] = u(keys[next(ki)], (4 * hidden_dim, hidden_dim), hidden_dim)
        params[f"bih{l}"] = u(keys[next(ki)], (4 * hidden_dim,), hidden_dim)
        params[f"bhh{l}"] = u(keys[next(ki)], (4 * hidden_dim,), hidden_dim)
    params["wfc"] = u(keys[next(ki)], (output_dim, hidden_dim), hidden_dim)
    params["bfc"] = u(keys[next(ki)], (output_dim,), hidden_dim)
    return params


if __name__ == "__main__":
    B, T = 2, 8
    input_dim, hidden_dim, output_dim, n_layers = 4, 32, 2, 2

    key = jax.random.PRNGKey(0)
    kx, kp = jax.random.split(key)
    x = jax.random.normal(kx, (B, T, input_dim), dtype=jnp.float32)
    params = _init_params(kp, input_dim, hidden_dim, output_dim, n_layers)

    # init_hidden(batch_size): zeros
    h0 = jnp.zeros((n_layers, B, hidden_dim), jnp.float32)
    c0 = jnp.zeros((n_layers, B, hidden_dim), jnp.float32)

    fwd = functools.partial(
        lstm_predictor_forward,
        n_layers=n_layers,
        hidden_dim=hidden_dim,
        output_dim=output_dim,
    )
    out, (h_n, c_n) = jax.jit(fwd)(x, (h0, c0), params)
    jax.block_until_ready((out, h_n, c_n))

    # verify against pure-JAX f32 reference (kernel uses bf16 MXU inputs with f32
    # accumulation, so a slightly loosened tolerance is expected).
    ref_out, (ref_h, ref_c) = _reference_forward(
        x, (h0, c0), params, n_layers=n_layers, hidden_dim=hidden_dim
    )
    assert jnp.allclose(out, ref_out, atol=3e-2, rtol=3e-2)
    assert jnp.allclose(h_n, ref_h, atol=3e-2, rtol=3e-2)
    assert jnp.allclose(c_n, ref_c, atol=3e-2, rtol=3e-2)

    print("KERNEL_OK")
</pallas_src>

<mosaic_0001>
module attributes {stable_mosaic.version = 11 : i64} {
  func.func @kernel(%arg0: i32, %arg1: memref<8x8x4xf32, #tpu.memory_space<vmem>>, %arg2: memref<2x8x32xf32, #tpu.memory_space<vmem>>, %arg3: memref<2x8x32xf32, #tpu.memory_space<vmem>>, %arg4: memref<4x16xbf16, #tpu.memory_space<vmem>>, %arg5: memref<1x16xf32, #tpu.memory_space<vmem>>, %arg6: memref<16x128xbf16, #tpu.memory_space<vmem>>, %arg7: memref<32x128xbf16, #tpu.memory_space<vmem>>, %arg8: memref<1x128xf32, #tpu.memory_space<vmem>>, %arg9: memref<32x128xbf16, #tpu.memory_space<vmem>>, %arg10: memref<32x128xbf16, #tpu.memory_space<vmem>>, %arg11: memref<1x128xf32, #tpu.memory_space<vmem>>, %arg12: memref<32x128xbf16, #tpu.memory_space<vmem>>, %arg13: memref<1x128xf32, #tpu.memory_space<vmem>>, %arg14: memref<8x128xf32, #tpu.memory_space<vmem>>, %arg15: memref<2x8x32xf32, #tpu.memory_space<vmem>>, %arg16: memref<2x8x32xf32, #tpu.memory_space<vmem>>, %arg17: memref<64x32xf32, #tpu.memory_space<vmem>>) attributes {dimension_semantics = [#tpu.dimension_semantics<parallel>], iteration_bounds = array<i64: 1>, scalar_prefetch = 0 : i64, scratch_operands = 1 : i64, tpu.core_type = #tpu.core_type<tc>, window_params = [{transform_indices = @transform_0, window_bounds = array<i64: 8, 8, 4>}, {transform_indices = @transform_1, window_bounds = array<i64: 2, 8, 32>}, {transform_indices = @transform_2, window_bounds = array<i64: 2, 8, 32>}, {pipeline_mode = #tpu.pipeline_mode<synchronous>, transform_indices = @transform_3, window_bounds = array<i64: 4, 16>}, {pipeline_mode = #tpu.pipeline_mode<synchronous>, transform_indices = @transform_4, window_bounds = array<i64: 1, 16>}, {pipeline_mode = #tpu.pipeline_mode<synchronous>, transform_indices = @transform_5, window_bounds = array<i64: 16, 128>}, {pipeline_mode = #tpu.pipeline_mode<synchronous>, transform_indices = @transform_6, window_bounds = array<i64: 32, 128>}, {pipeline_mode = #tpu.pipeline_mode<synchronous>, transform_indices = @transform_7, window_bounds = array<i64: 1, 128>}, {pipeline_mode = #tpu.pipeline_mode<synchronous>, transform_indices = @transform_8, window_bounds = array<i64: 32, 128>}, {pipeline_mode = #tpu.pipeline_mode<synchronous>, transform_indices = @transform_9, window_bounds = array<i64: 32, 128>}, {pipeline_mode = #tpu.pipeline_mode<synchronous>, transform_indices = @transform_10, window_bounds = array<i64: 1, 128>}, {pipeline_mode = #tpu.pipeline_mode<synchronous>, transform_indices = @transform_11, window_bounds = array<i64: 32, 128>}, {pipeline_mode = #tpu.pipeline_mode<synchronous>, transform_indices = @transform_12, window_bounds = array<i64: 1, 128>}, {transform_indices = @transform_13, window_bounds = array<i64: 8, 128>}, {transform_indices = @transform_14, window_bounds = array<i64: 2, 8, 32>}, {transform_indices = @transform_15, window_bounds = array<i64: 2, 8, 32>}]} {
    %c0 = arith.constant 0 : index
    %c0_0 = arith.constant 0 : index
    %c0_1 = arith.constant 0 : index
    %0 = vector.load %arg1[%c0, %c0_0, %c0_1] : memref<8x8x4xf32, #tpu.memory_space<vmem>>, vector<8x8x4xf32>
    %1 = vector.shape_cast %0 : vector<8x8x4xf32> to vector<64x4xf32>
    %2 = arith.truncf %1 : vector<64x4xf32> to vector<64x4xbf16>
    %c0_2 = arith.constant 0 : index
    %c0_3 = arith.constant 0 : index
    %3 = vector.load %arg4[%c0_2, %c0_3] : memref<4x16xbf16, #tpu.memory_space<vmem>>, vector<4x16xbf16>
    %cst = arith.constant dense<0.000000e+00> : vector<64x16xf32>
    %4 = tpu.matmul %2, %3, %cst {dimension_numbers = #tpu.dot_dimension_numbers<[1], [0], [0], [1], [0, 0, 1, 1], [], []>} : vector<64x4xbf16>, vector<4x16xbf16>, vector<64x16xf32> -> vector<64x16xf32>
    %c0_4 = arith.constant 0 : index
    %c0_5 = arith.constant 0 : index
    %5 = vector.load %arg5[%c0_4, %c0_5] : memref<1x16xf32, #tpu.memory_space<vmem>>, vector<1x16xf32>
    %6 = vector.broadcast %5 : vector<1x16xf32> to vector<64x16xf32>
    %7 = arith.addf %4, %6 : vector<64x16xf32>
    %cst_6 = arith.constant 0.000000e+00 : f32
    %8 = vector.broadcast %cst_6 : f32 to vector<64x16xf32>
    %9 = arith.maximumf %7, %8 : vector<64x16xf32>
    %10 = tpu.iota {dimensions = array<i32: 1>} : vector<8x128xi32>
    %c64_i32 = arith.constant 64 : i32
    %11 = vector.broadcast %c64_i32 : i32 to vector<8x128xi32>
    %12 = arith.cmpi sge, %10, %11 : vector<8x128xi32>
    %c96_i32 = arith.constant 96 : i32
    %13 = vector.broadcast %c96_i32 : i32 to vector<8x128xi32>
    %14 = arith.cmpi slt, %10, %13 : vector<8x128xi32>
    %15 = arith.andi %12, %14 : vector<8x128xi1>
    %c0_7 = arith.constant 0 : index
    %c0_8 = arith.constant 0 : index
    %16 = vector.load %arg7[%c0_7, %c0_8] : memref<32x128xbf16, #tpu.memory_space<vmem>>, vector<32x128xbf16>
    %17 = arith.truncf %9 : vector<64x16xf32> to vector<64x16xbf16>
    %c0_9 = arith.constant 0 : index
    %c0_10 = arith.constant 0 : index
    %18 = vector.load %arg6[%c0_9, %c0_10] : memref<16x128xbf16, #tpu.memory_space<vmem>>, vector<16x128xbf16>
    %cst_11 = arith.constant dense<0.000000e+00> : vector<64x128xf32>
    %19 = tpu.matmul %17, %18, %cst_11 {dimension_numbers = #tpu.dot_dimension_numbers<[1], [0], [0], [1], [0, 0, 1, 1], [], []>} : vector<64x16xbf16>, vector<16x128xbf16>, vector<64x128xf32> -> vector<64x128xf32>
    %c0_12 = arith.constant 0 : index
    %c0_13 = arith.constant 0 : index
    %20 = vector.load %arg8[%c0_12, %c0_13] : memref<1x128xf32, #tpu.memory_space<vmem>>, vector<1x128xf32>
    %21 = vector.broadcast %20 : vector<1x128xf32> to vector<64x128xf32>
    %22 = arith.addf %19, %21 : vector<64x128xf32>
    %c0_14 = arith.constant 0 : index
    %c0_15 = arith.constant 0 : index
    %c0_16 = arith.constant 0 : index
    %23 = vector.load %arg2[%c0_14, %c0_15, %c0_16] : memref<2x8x32xf32, #tpu.memory_space<vmem>>, vector<1x8x32xf32>
    %24 = vector.shape_cast %23 : vector<1x8x32xf32> to vector<8x32xf32>
    %c0_17 = arith.constant 0 : index
    %c0_18 = arith.constant 0 : index
    %c0_19 = arith.constant 0 : index
    %25 = vector.load %arg3[%c0_17, %c0_18, %c0_19] : memref<2x8x32xf32, #tpu.memory_space<vmem>>, vector<1x8x32xf32>
    %26 = vector.shape_cast %25 : vector<1x8x32xf32> to vector<8x32xf32>
    %27 = vector.extract_strided_slice %22 {offsets = [0, 0], sizes = [8, 128], strides = [1, 1]} : vector<64x128xf32> to vector<8x128xf32>
    %28 = arith.truncf %24 : vector<8x32xf32> to vector<8x32xbf16>
    %cst_20 = arith.constant dense<0.000000e+00> : vector<8x128xf32>
    %29 = tpu.matmul %28, %16, %cst_20 {dimension_numbers = #tpu.dot_dimension_numbers<[1], [0], [0], [1], [0, 0, 1, 1], [], []>} : vector<8x32xbf16>, vector<32x128xbf16>, vector<8x128xf32> -> vector<8x128xf32>
    %30 = arith.addf %27, %29 : vector<8x128xf32>
    %31 = arith.negf %30 : vector<8x128xf32>
    %32 = math.exp %31 : vector<8x128xf32>
    %cst_21 = arith.constant 1.000000e+00 : f32
    %33 = vector.broadcast %cst_21 : f32 to vector<8x128xf32>
    %34 = arith.addf %33, %32 : vector<8x128xf32>
    %35 = arith.divf %33, %34 : vector<8x128xf32>
    %36 = math.tanh %30 : vector<8x128xf32>
    %37 = arith.select %15, %36, %35 : vector<8x128xi1>, vector<8x128xf32>
    %38 = vector.extract_strided_slice %37 {offsets = [0, 0], sizes = [8, 32], strides = [1, 1]} : vector<8x128xf32> to vector<8x32xf32>
    %39 = vector.extract_strided_slice %37 {offsets = [0, 32], sizes = [8, 32], strides = [1, 1]} : vector<8x128xf32> to vector<8x32xf32>
    %40 = vector.extract_strided_slice %37 {offsets = [0, 64], sizes = [8, 32], strides = [1, 1]} : vector<8x128xf32> to vector<8x32xf32>
    %41 = vector.extract_strided_slice %37 {offsets = [0, 96], sizes = [8, 32], strides = [1, 1]} : vector<8x128xf32> to vector<8x32xf32>
    %42 = arith.mulf %39, %26 : vector<8x32xf32>
    %43 = arith.mulf %38, %40 : vector<8x32xf32>
    %44 = arith.addf %42, %43 : vector<8x32xf32>
    %45 = math.tanh %44 : vector<8x32xf32>
    %46 = arith.mulf %41, %45 : vector<8x32xf32>
    %c0_22 = arith.constant 0 : index
    %c0_23 = arith.constant 0 : index
    %47 = vector.load %arg17[%c0_22, %c0_23] : memref<64x32xf32, #tpu.memory_space<vmem>>, vector<8x32xf32>
    tpu.vector_store %arg17[%c0_22, %c0_23], %46 {strides = array<i32>} : memref<64x32xf32, #tpu.memory_space<vmem>>, vector<8x32xf32>,
    %48 = vector.extract_strided_slice %22 {offsets = [8, 0], sizes = [8, 128], strides = [1, 1]} : vector<64x128xf32> to vector<8x128xf32>
    %49 = arith.truncf %46 : vector<8x32xf32> to vector<8x32xbf16>
    %cst_24 = arith.constant dense<0.000000e+00> : vector<8x128xf32>
    %50 = tpu.matmul %49, %16, %cst_24 {dimension_numbers = #tpu.dot_dimension_numbers<[1], [0], [0], [1], [0, 0, 1, 1], [], []>} : vector<8x32xbf16>, vector<32x128xbf16>, vector<8x128xf32> -> vector<8x128xf32>
    %51 = arith.addf %48, %50 : vector<8x128xf32>
    %52 = arith.negf %51 : vector<8x128xf32>
    %53 = math.exp %52 : vector<8x128xf32>
    %cst_25 = arith.constant 1.000000e+00 : f32
    %54 = vector.broadcast %cst_25 : f32 to vector<8x128xf32>
    %55 = arith.addf %54, %53 : vector<8x128xf32>
    %56 = arith.divf %54, %55 : vector<8x128xf32>
    %57 = math.tanh %51 : vector<8x128xf32>
    %58 = arith.select %15, %57, %56 : vector<8x128xi1>, vector<8x128xf32>
    %59 = vector.extract_strided_slice %58 {offsets = [0, 0], sizes = [8, 32], strides = [1, 1]} : vector<8x128xf32> to vector<8x32xf32>
    %60 = vector.extract_strided_slice %58 {offsets = [0, 32], sizes = [8, 32], strides = [1, 1]} : vector<8x128xf32> to vector<8x32xf32>
    %61 = vector.extract_strided_slice %58 {offsets = [0, 64], sizes = [8, 32], strides = [1, 1]} : vector<8x128xf32> to vector<8x32xf32>
    %62 = vector.extract_strided_slice %58 {offsets = [0, 96], sizes = [8, 32], strides = [1, 1]} : vector<8x128xf32> to vector<8x32xf32>
    %63 = arith.mulf %60, %44 : vector<8x32xf32>
    %64 = arith.mulf %59, %61 : vector<8x32xf32>
    %65 = arith.addf %63, %64 : vector<8x32xf32>
    %66 = math.tanh %65 : vector<8x32xf32>
    %67 = arith.mulf %62, %66 : vector<8x32xf32>
    %c8 = arith.constant 8 : index
    %c0_26 = arith.constant 0 : index
    %68 = vector.load %arg17[%c8, %c0_26] : memref<64x32xf32, #tpu.memory_space<vmem>>, vector<8x32xf32>
    tpu.vector_store %arg17[%c8, %c0_26], %67 {strides = array<i32>} : memref<64x32xf32, #tpu.memory_space<vmem>>, vector<8x32xf32>,
    %69 = vector.extract_strided_slice %22 {offsets = [16, 0], sizes = [8, 128], strides = [1, 1]} : vector<64x128xf32> to vector<8x128xf32>
    %70 = arith.truncf %67 : vector<8x32xf32> to vector<8x32xbf16>
    %cst_27 = arith.constant dense<0.000000e+00> : vector<8x128xf32>
    %71 = tpu.matmul %70, %16, %cst_27 {dimension_numbers = #tpu.dot_dimension_numbers<[1], [0], [0], [1], [0, 0, 1, 1], [], []>} : vector<8x32xbf16>, vector<32x128xbf16>, vector<8x128xf32> -> vector<8x128xf32>
    %72 = arith.addf %69, %71 : vector<8x128xf32>
    %73 = arith.negf %72 : vector<8x128xf32>
    %74 = math.exp %73 : vector<8x128xf32>
    %cst_28 = arith.constant 1.000000e+00 : f32
    %75 = vector.broadcast %cst_28 : f32 to vector<8x128xf32>
    %76 = arith.addf %75, %74 : vector<8x128xf32>
    %77 = arith.divf %75, %76 : vector<8x128xf32>
    %78 = math.tanh %72 : vector<8x128xf32>
    %79 = arith.select %15, %78, %77 : vector<8x128xi1>, vector<8x128xf32>
    %80 = vector.extract_strided_slice %79 {offsets = [0, 0], sizes = [8, 32], strides = [1, 1]} : vector<8x128xf32> to vector<8x32xf32>
    %81 = vector.extract_strided_slice %79 {offsets = [0, 32], sizes = [8, 32], strides = [1, 1]} : vector<8x128xf32> to vector<8x32xf32>
    %82 = vector.extract_strided_slice %79 {offsets = [0, 64], sizes = [8, 32], strides = [1, 1]} : vector<8x128xf32> to vector<8x32xf32>
    %83 = vector.extract_strided_slice %79 {offsets = [0, 96], sizes = [8, 32], strides = [1, 1]} : vector<8x128xf32> to vector<8x32xf32>
    %84 = arith.mulf %81, %65 : vector<8x32xf32>
    %85 = arith.mulf %80, %82 : vector<8x32xf32>
    %86 = arith.addf %84, %85 : vector<8x32xf32>
    %87 = math.tanh %86 : vector<8x32xf32>
    %88 = arith.mulf %83, %87 : vector<8x32xf32>
    %c16 = arith.constant 16 : index
    %c0_29 = arith.constant 0 : index
    %89 = vector.load %arg17[%c16, %c0_29] : memref<64x32xf32, #tpu.memory_space<vmem>>, vector<8x32xf32>
    tpu.vector_store %arg17[%c16, %c0_29], %88 {strides = array<i32>} : memref<64x32xf32, #tpu.memory_space<vmem>>, vector<8x32xf32>,
    %90 = vector.extract_strided_slice %22 {offsets = [24, 0], sizes = [8, 128], strides = [1, 1]} : vector<64x128xf32> to vector<8x128xf32>
    %91 = arith.truncf %88 : vector<8x32xf32> to vector<8x32xbf16>
    %cst_30 = arith.constant dense<0.000000e+00> : vector<8x128xf32>
    %92 = tpu.matmul %91, %16, %cst_30 {dimension_numbers = #tpu.dot_dimension_numbers<[1], [0], [0], [1], [0, 0, 1, 1], [], []>} : vector<8x32xbf16>, vector<32x128xbf16>, vector<8x128xf32> -> vector<8x128xf32>
    %93 = arith.addf %90, %92 : vector<8x128xf32>
    %94 = arith.negf %93 : vector<8x128xf32>
    %95 = math.exp %94 : vector<8x128xf32>
    %cst_31 = arith.constant 1.000000e+00 : f32
    %96 = vector.broadcast %cst_31 : f32 to vector<8x128xf32>
    %97 = arith.addf %96, %95 : vector<8x128xf32>
    %98 = arith.divf %96, %97 : vector<8x128xf32>
    %99 = math.tanh %93 : vector<8x128xf32>
    %100 = arith.select %15, %99, %98 : vector<8x128xi1>, vector<8x128xf32>
    %101 = vector.extract_strided_slice %100 {offsets = [0, 0], sizes = [8, 32], strides = [1, 1]} : vector<8x128xf32> to vector<8x32xf32>
    %102 = vector.extract_strided_slice %100 {offsets = [0, 32], sizes = [8, 32], strides = [1, 1]} : vector<8x128xf32> to vector<8x32xf32>
    %103 = vector.extract_strided_slice %100 {offsets = [0, 64], sizes = [8, 32], strides = [1, 1]} : vector<8x128xf32> to vector<8x32xf32>
    %104 = vector.extract_strided_slice %100 {offsets = [0, 96], sizes = [8, 32], strides = [1, 1]} : vector<8x128xf32> to vector<8x32xf32>
    %105 = arith.mulf %102, %86 : vector<8x32xf32>
    %106 = arith.mulf %101, %103 : vector<8x32xf32>
    %107 = arith.addf %105, %106 : vector<8x32xf32>
    %108 = math.tanh %107 : vector<8x32xf32>
    %109 = arith.mulf %104, %108 : vector<8x32xf32>
    %c24 = arith.constant 24 : index
    %c0_32 = arith.constant 0 : index
    %110 = vector.load %arg17[%c24, %c0_32] : memref<64x32xf32, #tpu.memory_space<vmem>>, vector<8x32xf32>
    tpu.vector_store %arg17[%c24, %c0_32], %109 {strides = array<i32>} : memref<64x32xf32, #tpu.memory_space<vmem>>, vector<8x32xf32>,
    %111 = vector.extract_strided_slice %22 {offsets = [32, 0], sizes = [8, 128], strides = [1, 1]} : vector<64x128xf32> to vector<8x128xf32>
    %112 = arith.truncf %109 : vector<8x32xf32> to vector<8x32xbf16>
    %cst_33 = arith.constant dense<0.000000e+00> : vector<8x128xf32>
    %113 = tpu.matmul %112, %16, %cst_33 {dimension_numbers = #tpu.dot_dimension_numbers<[1], [0], [0], [1], [0, 0, 1, 1], [], []>} : vector<8x32xbf16>, vector<32x128xbf16>, vector<8x128xf32> -> vector<8x128xf32>
    %114 = arith.addf %111, %113 : vector<8x128xf32>
    %115 = arith.negf %114 : vector<8x128xf32>
    %116 = math.exp %115 : vector<8x128xf32>
    %cst_34 = arith.constant 1.000000e+00 : f32
    %117 = vector.broadcast %cst_34 : f32 to vector<8x128xf32>
    %118 = arith.addf %117, %116 : vector<8x128xf32>
    %119 = arith.divf %117, %118 : vector<8x128xf32>
    %120 = math.tanh %114 : vector<8x128xf32>
    %121 = arith.select %15, %120, %119 : vector<8x128xi1>, vector<8x128xf32>
    %122 = vector.extract_strided_slice %121 {offsets = [0, 0], sizes = [8, 32], strides = [1, 1]} : vector<8x128xf32> to vector<8x32xf32>
    %123 = vector.extract_strided_slice %121 {offsets = [0, 32], sizes = [8, 32], strides = [1, 1]} : vector<8x128xf32> to vector<8x32xf32>
    %124 = vector.extract_strided_slice %121 {offsets = [0, 64], sizes = [8, 32], strides = [1, 1]} : vector<8x128xf32> to vector<8x32xf32>
    %125 = vector.extract_strided_slice %121 {offsets = [0, 96], sizes = [8, 32], strides = [1, 1]} : vector<8x128xf32> to vector<8x32xf32>
    %126 = arith.mulf %123, %107 : vector<8x32xf32>
    %127 = arith.mulf %122, %124 : vector<8x32xf32>
    %128 = arith.addf %126, %127 : vector<8x32xf32>
    %129 = math.tanh %128 : vector<8x32xf32>
    %130 = arith.mulf %125, %129 : vector<8x32xf32>
    %c32 = arith.constant 32 : index
    %c0_35 = arith.constant 0 : index
    %131 = vector.load %arg17[%c32, %c0_35] : memref<64x32xf32, #tpu.memory_space<vmem>>, vector<8x32xf32>
    tpu.vector_store %arg17[%c32, %c0_35], %130 {strides = array<i32>} : memref<64x32xf32, #tpu.memory_space<vmem>>, vector<8x32xf32>,
    %132 = vector.extract_strided_slice %22 {offsets = [40, 0], sizes = [8, 128], strides = [1, 1]} : vector<64x128xf32> to vector<8x128xf32>
    %133 = arith.truncf %130 : vector<8x32xf32> to vector<8x32xbf16>
    %cst_36 = arith.constant dense<0.000000e+00> : vector<8x128xf32>
    %134 = tpu.matmul %133, %16, %cst_36 {dimension_numbers = #tpu.dot_dimension_numbers<[1], [0], [0], [1], [0, 0, 1, 1], [], []>} : vector<8x32xbf16>, vector<32x128xbf16>, vector<8x128xf32> -> vector<8x128xf32>
    %135 = arith.addf %132, %134 : vector<8x128xf32>
    %136 = arith.negf %135 : vector<8x128xf32>
    %137 = math.exp %136 : vector<8x128xf32>
    %cst_37 = arith.constant 1.000000e+00 : f32
    %138 = vector.broadcast %cst_37 : f32 to vector<8x128xf32>
    %139 = arith.addf %138, %137 : vector<8x128xf32>
    %140 = arith.divf %138, %139 : vector<8x128xf32>
    %141 = math.tanh %135 : vector<8x128xf32>
    %142 = arith.select %15, %141, %140 : vector<8x128xi1>, vector<8x128xf32>
    %143 = vector.extract_strided_slice %142 {offsets = [0, 0], sizes = [8, 32], strides = [1, 1]} : vector<8x128xf32> to vector<8x32xf32>
    %144 = vector.extract_strided_slice %142 {offsets = [0, 32], sizes = [8, 32], strides = [1, 1]} : vector<8x128xf32> to vector<8x32xf32>
    %145 = vector.extract_strided_slice %142 {offsets = [0, 64], sizes = [8, 32], strides = [1, 1]} : vector<8x128xf32> to vector<8x32xf32>
    %146 = vector.extract_strided_slice %142 {offsets = [0, 96], sizes = [8, 32], strides = [1, 1]} : vector<8x128xf32> to vector<8x32xf32>
    %147 = arith.mulf %144, %128 : vector<8x32xf32>
    %148 = arith.mulf %143, %145 : vector<8x32xf32>
    %149 = arith.addf %147, %148 : vector<8x32xf32>
    %150 = math.tanh %149 : vector<8x32xf32>
    %151 = arith.mulf %146, %150 : vector<8x32xf32>
    %c40 = arith.constant 40 : index
    %c0_38 = arith.constant 0 : index
    %152 = vector.load %arg17[%c40, %c0_38] : memref<64x32xf32, #tpu.memory_space<vmem>>, vector<8x32xf32>
    tpu.vector_store %arg17[%c40, %c0_38], %151 {strides = array<i32>} : memref<64x32xf32, #tpu.memory_space<vmem>>, vector<8x32xf32>,
    %153 = vector.extract_strided_slice %22 {offsets = [48, 0], sizes = [8, 128], strides = [1, 1]} : vector<64x128xf32> to vector<8x128xf32>
    %154 = arith.truncf %151 : vector<8x32xf32> to vector<8x32xbf16>
    %cst_39 = arith.constant dense<0.000000e+00> : vector<8x128xf32>
    %155 = tpu.matmul %154, %16, %cst_39 {dimension_numbers = #tpu.dot_dimension_numbers<[1], [0], [0], [1], [0, 0, 1, 1], [], []>} : vector<8x32xbf16>, vector<32x128xbf16>, vector<8x128xf32> -> vector<8x128xf32>
    %156 = arith.addf %153, %155 : vector<8x128xf32>
    %157 = arith.negf %156 : vector<8x128xf32>
    %158 = math.exp %157 : vector<8x128xf32>
    %cst_40 = arith.constant 1.000000e+00 : f32
    %159 = vector.broadcast %cst_40 : f32 to vector<8x128xf32>
    %160 = arith.addf %159, %158 : vector<8x128xf32>
    %161 = arith.divf %159, %160 : vector<8x128xf32>
    %162 = math.tanh %156 : vector<8x128xf32>
    %163 = arith.select %15, %162, %161 : vector<8x128xi1>, vector<8x128xf32>
    %164 = vector.extract_strided_slice %163 {offsets = [0, 0], sizes = [8, 32], strides = [1, 1]} : vector<8x128xf32> to vector<8x32xf32>
    %165 = vector.extract_strided_slice %163 {offsets = [0, 32], sizes = [8, 32], strides = [1, 1]} : vector<8x128xf32> to vector<8x32xf32>
    %166 = vector.extract_strided_slice %163 {offsets = [0, 64], sizes = [8, 32], strides = [1, 1]} : vector<8x128xf32> to vector<8x32xf32>
    %167 = vector.extract_strided_slice %163 {offsets = [0, 96], sizes = [8, 32], strides = [1, 1]} : vector<8x128xf32> to vector<8x32xf32>
    %168 = arith.mulf %165, %149 : vector<8x32xf32>
    %169 = arith.mulf %164, %166 : vector<8x32xf32>
    %170 = arith.addf %168, %169 : vector<8x32xf32>
    %171 = math.tanh %170 : vector<8x32xf32>
    %172 = arith.mulf %167, %171 : vector<8x32xf32>
    %c48 = arith.constant 48 : index
    %c0_41 = arith.constant 0 : index
    %173 = vector.load %arg17[%c48, %c0_41] : memref<64x32xf32, #tpu.memory_space<vmem>>, vector<8x32xf32>
    tpu.vector_store %arg17[%c48, %c0_41], %172 {strides = array<i32>} : memref<64x32xf32, #tpu.memory_space<vmem>>, vector<8x32xf32>,
    %174 = vector.extract_strided_slice %22 {offsets = [56, 0], sizes = [8, 128], strides = [1, 1]} : vector<64x128xf32> to vector<8x128xf32>
    %175 = arith.truncf %172 : vector<8x32xf32> to vector<8x32xbf16>
    %cst_42 = arith.constant dense<0.000000e+00> : vector<8x128xf32>
    %176 = tpu.matmul %175, %16, %cst_42 {dimension_numbers = #tpu.dot_dimension_numbers<[1], [0], [0], [1], [0, 0, 1, 1], [], []>} : vector<8x32xbf16>, vector<32x128xbf16>, vector<8x128xf32> -> vector<8x128xf32>
    %177 = arith.addf %174, %176 : vector<8x128xf32>
    %178 = arith.negf %177 : vector<8x128xf32>
    %179 = math.exp %178 : vector<8x128xf32>
    %cst_43 = arith.constant 1.000000e+00 : f32
    %180 = vector.broadcast %cst_43 : f32 to vector<8x128xf32>
    %181 = arith.addf %180, %179 : vector<8x128xf32>
    %182 = arith.divf %180, %181 : vector<8x128xf32>
    %183 = math.tanh %177 : vector<8x128xf32>
    %184 = arith.select %15, %183, %182 : vector<8x128xi1>, vector<8x128xf32>
    %185 = vector.extract_strided_slice %184 {offsets = [0, 0], sizes = [8, 32], strides = [1, 1]} : vector<8x128xf32> to vector<8x32xf32>
    %186 = vector.extract_strided_slice %184 {offsets = [0, 32], sizes = [8, 32], strides = [1, 1]} : vector<8x128xf32> to vector<8x32xf32>
    %187 = vector.extract_strided_slice %184 {offsets = [0, 64], sizes = [8, 32], strides = [1, 1]} : vector<8x128xf32> to vector<8x32xf32>
    %188 = vector.extract_strided_slice %184 {offsets = [0, 96], sizes = [8, 32], strides = [1, 1]} : vector<8x128xf32> to vector<8x32xf32>
    %189 = arith.mulf %186, %170 : vector<8x32xf32>
    %190 = arith.mulf %185, %187 : vector<8x32xf32>
    %191 = arith.addf %189, %190 : vector<8x32xf32>
    %192 = math.tanh %191 : vector<8x32xf32>
    %193 = arith.mulf %188, %192 : vector<8x32xf32>
    %c56 = arith.constant 56 : index
    %c0_44 = arith.constant 0 : index
    %194 = vector.load %arg17[%c56, %c0_44] : memref<64x32xf32, #tpu.memory_space<vmem>>, vector<8x32xf32>
    tpu.vector_store %arg17[%c56, %c0_44], %193 {strides = array<i32>} : memref<64x32xf32, #tpu.memory_space<vmem>>, vector<8x32xf32>,
    %c0_45 = arith.constant 0 : index
    %c0_46 = arith.constant 0 : index
    %c0_47 = arith.constant 0 : index
    %195 = vector.load %arg15[%c0_45, %c0_46, %c0_47] : memref<2x8x32xf32, #tpu.memory_space<vmem>>, vector<1x8x32xf32>
    %196 = vector.shape_cast %195 : vector<1x8x32xf32> to vector<8x32xf32>
    %197 = vector.shape_cast %193 : vector<8x32xf32> to vector<1x8x32xf32>
    tpu.vector_store %arg15[%c0_45, %c0_46, %c0_47], %197 {strides = array<i32>} : memref<2x8x32xf32, #tpu.memory_space<vmem>>, vector<1x8x32xf32>,
    %c0_48 = arith.constant 0 : index
    %c0_49 = arith.constant 0 : index
    %c0_50 = arith.constant 0 : index
    %198 = vector.load %arg16[%c0_48, %c0_49, %c0_50] : memref<2x8x32xf32, #tpu.memory_space<vmem>>, vector<1x8x32xf32>
    %199 = vector.shape_cast %198 : vector<1x8x32xf32> to vector<8x32xf32>
    %200 = vector.shape_cast %191 : vector<8x32xf32> to vector<1x8x32xf32>
    tpu.vector_store %arg16[%c0_48, %c0_49, %c0_50], %200 {strides = array<i32>} : memref<2x8x32xf32, #tpu.memory_space<vmem>>, vector<1x8x32xf32>,
    %c0_51 = arith.constant 0 : index
    %c0_52 = arith.constant 0 : index
    %201 = vector.load %arg17[%c0_51, %c0_52] : memref<64x32xf32, #tpu.memory_space<vmem>>, vector<64x32xf32>
    %c0_53 = arith.constant 0 : index
    %c0_54 = arith.constant 0 : index
    %202 = vector.load %arg10[%c0_53, %c0_54] : memref<32x128xbf16, #tpu.memory_space<vmem>>, vector<32x128xbf16>
    %203 = arith.truncf %201 : vector<64x32xf32> to vector<64x32xbf16>
    %c0_55 = arith.constant 0 : index
    %c0_56 = arith.constant 0 : index
    %204 = vector.load %arg9[%c0_55, %c0_56] : memref<32x128xbf16, #tpu.memory_space<vmem>>, vector<32x128xbf16>
    %cst_57 = arith.constant dense<0.000000e+00> : vector<64x128xf32>
    %205 = tpu.matmul %203, %204, %cst_57 {dimension_numbers = #tpu.dot_dimension_numbers<[1], [0], [0], [1], [0, 0, 1, 1], [], []>} : vector<64x32xbf16>, vector<32x128xbf16>, vector<64x128xf32> -> vector<64x128xf32>
    %c0_58 = arith.constant 0 : index
    %c0_59 = arith.constant 0 : index
    %206 = vector.load %arg11[%c0_58, %c0_59] : memref<1x128xf32, #tpu.memory_space<vmem>>, vector<1x128xf32>
    %207 = vector.broadcast %206 : vector<1x128xf32> to vector<64x128xf32>
    %208 = arith.addf %205, %207 : vector<64x128xf32>
    %c1 = arith.constant 1 : index
    %c0_60 = arith.constant 0 : index
    %c0_61 = arith.constant 0 : index
    %209 = vector.load %arg2[%c1, %c0_60, %c0_61] : memref<2x8x32xf32, #tpu.memory_space<vmem>>, vector<1x8x32xf32>
    %210 = vector.shape_cast %209 : vector<1x8x32xf32> to vector<8x32xf32>
    %c1_62 = arith.constant 1 : index
    %c0_63 = arith.constant 0 : index
    %c0_64 = arith.constant 0 : index
    %211 = vector.load %arg3[%c1_62, %c0_63, %c0_64] : memref<2x8x32xf32, #tpu.memory_space<vmem>>, vector<1x8x32xf32>
    %212 = vector.shape_cast %211 : vector<1x8x32xf32> to vector<8x32xf32>
    %213 = vector.extract_strided_slice %208 {offsets = [0, 0], sizes = [8, 128], strides = [1, 1]} : vector<64x128xf32> to vector<8x128xf32>
    %214 = arith.truncf %210 : vector<8x32xf32> to vector<8x32xbf16>
    %cst_65 = arith.constant dense<0.000000e+00> : vector<8x128xf32>
    %215 = tpu.matmul %214, %202, %cst_65 {dimension_numbers = #tpu.dot_dimension_numbers<[1], [0], [0], [1], [0, 0, 1, 1], [], []>} : vector<8x32xbf16>, vector<32x128xbf16>, vector<8x128xf32> -> vector<8x128xf32>
    %216 = arith.addf %213, %215 : vector<8x128xf32>
    %217 = arith.negf %216 : vector<8x128xf32>
    %218 = math.exp %217 : vector<8x128xf32>
    %cst_66 = arith.constant 1.000000e+00 : f32
    %219 = vector.broadcast %cst_66 : f32 to vector<8x128xf32>
    %220 = arith.addf %219, %218 : vector<8x128xf32>
    %221 = arith.divf %219, %220 : vector<8x128xf32>
    %222 = math.tanh %216 : vector<8x128xf32>
    %223 = arith.select %15, %222, %221 : vector<8x128xi1>, vector<8x128xf32>
    %224 = vector.extract_strided_slice %223 {offsets = [0, 0], sizes = [8, 32], strides = [1, 1]} : vector<8x128xf32> to vector<8x32xf32>
    %225 = vector.extract_strided_slice %223 {offsets = [0, 32], sizes = [8, 32], strides = [1, 1]} : vector<8x128xf32> to vector<8x32xf32>
    %226 = vector.extract_strided_slice %223 {offsets = [0, 64], sizes = [8, 32], strides = [1, 1]} : vector<8x128xf32> to vector<8x32xf32>
    %227 = vector.extract_strided_slice %223 {offsets = [0, 96], sizes = [8, 32], strides = [1, 1]} : vector<8x128xf32> to vector<8x32xf32>
    %228 = arith.mulf %225, %212 : vector<8x32xf32>
    %229 = arith.mulf %224, %226 : vector<8x32xf32>
    %230 = arith.addf %228, %229 : vector<8x32xf32>
    %231 = math.tanh %230 : vector<8x32xf32>
    %232 = arith.mulf %227, %231 : vector<8x32xf32>
    %233 = vector.extract_strided_slice %208 {offsets = [8, 0], sizes = [8, 128], strides = [1, 1]} : vector<64x128xf32> to vector<8x128xf32>
    %234 = arith.truncf %232 : vector<8x32xf32> to vector<8x32xbf16>
    %cst_67 = arith.constant dense<0.000000e+00> : vector<8x128xf32>
    %235 = tpu.matmul %234, %202, %cst_67 {dimension_numbers = #tpu.dot_dimension_numbers<[1], [0], [0], [1], [0, 0, 1, 1], [], []>} : vector<8x32xbf16>, vector<32x128xbf16>, vector<8x128xf32> -> vector<8x128xf32>
    %236 = arith.addf %233, %235 : vector<8x128xf32>
    %237 = arith.negf %236 : vector<8x128xf32>
    %238 = math.exp %237 : vector<8x128xf32>
    %cst_68 = arith.constant 1.000000e+00 : f32
    %239 = vector.broadcast %cst_68 : f32 to vector<8x128xf32>
    %240 = arith.addf %239, %238 : vector<8x128xf32>
    %241 = arith.divf %239, %240 : vector<8x128xf32>
    %242 = math.tanh %236 : vector<8x128xf32>
    %243 = arith.select %15, %242, %241 : vector<8x128xi1>, vector<8x128xf32>
    %244 = vector.extract_strided_slice %243 {offsets = [0, 0], sizes = [8, 32], strides = [1, 1]} : vector<8x128xf32> to vector<8x32xf32>
    %245 = vector.extract_strided_slice %243 {offsets = [0, 32], sizes = [8, 32], strides = [1, 1]} : vector<8x128xf32> to vector<8x32xf32>
    %246 = vector.extract_strided_slice %243 {offsets = [0, 64], sizes = [8, 32], strides = [1, 1]} : vector<8x128xf32> to vector<8x32xf32>
    %247 = vector.extract_strided_slice %243 {offsets = [0, 96], sizes = [8, 32], strides = [1, 1]} : vector<8x128xf32> to vector<8x32xf32>
    %248 = arith.mulf %245, %230 : vector<8x32xf32>
    %249 = arith.mulf %244, %246 : vector<8x32xf32>
    %250 = arith.addf %248, %249 : vector<8x32xf32>
    %251 = math.tanh %250 : vector<8x32xf32>
    %252 = arith.mulf %247, %251 : vector<8x32xf32>
    %253 = vector.extract_strided_slice %208 {offsets = [16, 0], sizes = [8, 128], strides = [1, 1]} : vector<64x128xf32> to vector<8x128xf32>
    %254 = arith.truncf %252 : vector<8x32xf32> to vector<8x32xbf16>
    %cst_69 = arith.constant dense<0.000000e+00> : vector<8x128xf32>
    %255 = tpu.matmul %254, %202, %cst_69 {dimension_numbers = #tpu.dot_dimension_numbers<[1], [0], [0], [1], [0, 0, 1, 1], [], []>} : vector<8x32xbf16>, vector<32x128xbf16>, vector<8x128xf32> -> vector<8x128xf32>
    %256 = arith.addf %253, %255 : vector<8x128xf32>
    %257 = arith.negf %256 : vector<8x128xf32>
    %258 = math.exp %257 : vector<8x128xf32>
    %cst_70 = arith.constant 1.000000e+00 : f32
    %259 = vector.broadcast %cst_70 : f32 to vector<8x128xf32>
    %260 = arith.addf %259, %258 : vector<8x128xf32>
    %261 = arith.divf %259, %260 : vector<8x128xf32>
    %262 = math.tanh %256 : vector<8x128xf32>
    %263 = arith.select %15, %262, %261 : vector<8x128xi1>, vector<8x128xf32>
    %264 = vector.extract_strided_slice %263 {offsets = [0, 0], sizes = [8, 32], strides = [1, 1]} : vector<8x128xf32> to vector<8x32xf32>
    %265 = vector.extract_strided_slice %263 {offsets = [0, 32], sizes = [8, 32], strides = [1, 1]} : vector<8x128xf32> to vector<8x32xf32>
    %266 = vector.extract_strided_slice %263 {offsets = [0, 64], sizes = [8, 32], strides = [1, 1]} : vector<8x128xf32> to vector<8x32xf32>
    %267 = vector.extract_strided_slice %263 {offsets = [0, 96], sizes = [8, 32], strides = [1, 1]} : vector<8x128xf32> to vector<8x32xf32>
    %268 = arith.mulf %265, %250 : vector<8x32xf32>
    %269 = arith.mulf %264, %266 : vector<8x32xf32>
    %270 = arith.addf %268, %269 : vector<8x32xf32>
    %271 = math.tanh %270 : vector<8x32xf32>
    %272 = arith.mulf %267, %271 : vector<8x32xf32>
    %273 = vector.extract_strided_slice %208 {offsets = [24, 0], sizes = [8, 128], strides = [1, 1]} : vector<64x128xf32> to vector<8x128xf32>
    %274 = arith.truncf %272 : vector<8x32xf32> to vector<8x32xbf16>
    %cst_71 = arith.constant dense<0.000000e+00> : vector<8x128xf32>
    %275 = tpu.matmul %274, %202, %cst_71 {dimension_numbers = #tpu.dot_dimension_numbers<[1], [0], [0], [1], [0, 0, 1, 1], [], []>} : vector<8x32xbf16>, vector<32x128xbf16>, vector<8x128xf32> -> vector<8x128xf32>
    %276 = arith.addf %273, %275 : vector<8x128xf32>
    %277 = arith.negf %276 : vector<8x128xf32>
    %278 = math.exp %277 : vector<8x128xf32>
    %cst_72 = arith.constant 1.000000e+00 : f32
    %279 = vector.broadcast %cst_72 : f32 to vector<8x128xf32>
    %280 = arith.addf %279, %278 : vector<8x128xf32>
    %281 = arith.divf %279, %280 : vector<8x128xf32>
    %282 = math.tanh %276 : vector<8x128xf32>
    %283 = arith.select %15, %282, %281 : vector<8x128xi1>, vector<8x128xf32>
    %284 = vector.extract_strided_slice %283 {offsets = [0, 0], sizes = [8, 32], strides = [1, 1]} : vector<8x128xf32> to vector<8x32xf32>
    %285 = vector.extract_strided_slice %283 {offsets = [0, 32], sizes = [8, 32], strides = [1, 1]} : vector<8x128xf32> to vector<8x32xf32>
    %286 = vector.extract_strided_slice %283 {offsets = [0, 64], sizes = [8, 32], strides = [1, 1]} : vector<8x128xf32> to vector<8x32xf32>
    %287 = vector.extract_strided_slice %283 {offsets = [0, 96], sizes = [8, 32], strides = [1, 1]} : vector<8x128xf32> to vector<8x32xf32>
    %288 = arith.mulf %285, %270 : vector<8x32xf32>
    %289 = arith.mulf %284, %286 : vector<8x32xf32>
    %290 = arith.addf %288, %289 : vector<8x32xf32>
    %291 = math.tanh %290 : vector<8x32xf32>
    %292 = arith.mulf %287, %291 : vector<8x32xf32>
    %293 = vector.extract_strided_slice %208 {offsets = [32, 0], sizes = [8, 128], strides = [1, 1]} : vector<64x128xf32> to vector<8x128xf32>
    %294 = arith.truncf %292 : vector<8x32xf32> to vector<8x32xbf16>
    %cst_73 = arith.constant dense<0.000000e+00> : vector<8x128xf32>
    %295 = tpu.matmul %294, %202, %cst_73 {dimension_numbers = #tpu.dot_dimension_numbers<[1], [0], [0], [1], [0, 0, 1, 1], [], []>} : vector<8x32xbf16>, vector<32x128xbf16>, vector<8x128xf32> -> vector<8x128xf32>
    %296 = arith.addf %293, %295 : vector<8x128xf32>
    %297 = arith.negf %296 : vector<8x128xf32>
    %298 = math.exp %297 : vector<8x128xf32>
    %cst_74 = arith.constant 1.000000e+00 : f32
    %299 = vector.broadcast %cst_74 : f32 to vector<8x128xf32>
    %300 = arith.addf %299, %298 : vector<8x128xf32>
    %301 = arith.divf %299, %300 : vector<8x128xf32>
    %302 = math.tanh %296 : vector<8x128xf32>
    %303 = arith.select %15, %302, %301 : vector<8x128xi1>, vector<8x128xf32>
    %304 = vector.extract_strided_slice %303 {offsets = [0, 0], sizes = [8, 32], strides = [1, 1]} : vector<8x128xf32> to vector<8x32xf32>
    %305 = vector.extract_strided_slice %303 {offsets = [0, 32], sizes = [8, 32], strides = [1, 1]} : vector<8x128xf32> to vector<8x32xf32>
    %306 = vector.extract_strided_slice %303 {offsets = [0, 64], sizes = [8, 32], strides = [1, 1]} : vector<8x128xf32> to vector<8x32xf32>
    %307 = vector.extract_strided_slice %303 {offsets = [0, 96], sizes = [8, 32], strides = [1, 1]} : vector<8x128xf32> to vector<8x32xf32>
    %308 = arith.mulf %305, %290 : vector<8x32xf32>
    %309 = arith.mulf %304, %306 : vector<8x32xf32>
    %310 = arith.addf %308, %309 : vector<8x32xf32>
    %311 = math.tanh %310 : vector<8x32xf32>
    %312 = arith.mulf %307, %311 : vector<8x32xf32>
    %313 = vector.extract_strided_slice %208 {offsets = [40, 0], sizes = [8, 128], strides = [1, 1]} : vector<64x128xf32> to vector<8x128xf32>
    %314 = arith.truncf %312 : vector<8x32xf32> to vector<8x32xbf16>
    %cst_75 = arith.constant dense<0.000000e+00> : vector<8x128xf32>
    %315 = tpu.matmul %314, %202, %cst_75 {dimension_numbers = #tpu.dot_dimension_numbers<[1], [0], [0], [1], [0, 0, 1, 1], [], []>} : vector<8x32xbf16>, vector<32x128xbf16>, vector<8x128xf32> -> vector<8x128xf32>
    %316 = arith.addf %313, %315 : vector<8x128xf32>
    %317 = arith.negf %316 : vector<8x128xf32>
    %318 = math.exp %317 : vector<8x128xf32>
    %cst_76 = arith.constant 1.000000e+00 : f32
    %319 = vector.broadcast %cst_76 : f32 to vector<8x128xf32>
    %320 = arith.addf %319, %318 : vector<8x128xf32>
    %321 = arith.divf %319, %320 : vector<8x128xf32>
    %322 = math.tanh %316 : vector<8x128xf32>
    %323 = arith.select %15, %322, %321 : vector<8x128xi1>, vector<8x128xf32>
    %324 = vector.extract_strided_slice %323 {offsets = [0, 0], sizes = [8, 32], strides = [1, 1]} : vector<8x128xf32> to vector<8x32xf32>
    %325 = vector.extract_strided_slice %323 {offsets = [0, 32], sizes = [8, 32], strides = [1, 1]} : vector<8x128xf32> to vector<8x32xf32>
    %326 = vector.extract_strided_slice %323 {offsets = [0, 64], sizes = [8, 32], strides = [1, 1]} : vector<8x128xf32> to vector<8x32xf32>
    %327 = vector.extract_strided_slice %323 {offsets = [0, 96], sizes = [8, 32], strides = [1, 1]} : vector<8x128xf32> to vector<8x32xf32>
    %328 = arith.mulf %325, %310 : vector<8x32xf32>
    %329 = arith.mulf %324, %326 : vector<8x32xf32>
    %330 = arith.addf %328, %329 : vector<8x32xf32>
    %331 = math.tanh %330 : vector<8x32xf32>
    %332 = arith.mulf %327, %331 : vector<8x32xf32>
    %333 = vector.extract_strided_slice %208 {offsets = [48, 0], sizes = [8, 128], strides = [1, 1]} : vector<64x128xf32> to vector<8x128xf32>
    %334 = arith.truncf %332 : vector<8x32xf32> to vector<8x32xbf16>
    %cst_77 = arith.constant dense<0.000000e+00> : vector<8x128xf32>
    %335 = tpu.matmul %334, %202, %cst_77 {dimension_numbers = #tpu.dot_dimension_numbers<[1], [0], [0], [1], [0, 0, 1, 1], [], []>} : vector<8x32xbf16>, vector<32x128xbf16>, vector<8x128xf32> -> vector<8x128xf32>
    %336 = arith.addf %333, %335 : vector<8x128xf32>
    %337 = arith.negf %336 : vector<8x128xf32>
    %338 = math.exp %337 : vector<8x128xf32>
    %cst_78 = arith.constant 1.000000e+00 : f32
    %339 = vector.broadcast %cst_78 : f32 to vector<8x128xf32>
    %340 = arith.addf %339, %338 : vector<8x128xf32>
    %341 = arith.divf %339, %340 : vector<8x128xf32>
    %342 = math.tanh %336 : vector<8x128xf32>
    %343 = arith.select %15, %342, %341 : vector<8x128xi1>, vector<8x128xf32>
    %344 = vector.extract_strided_slice %343 {offsets = [0, 0], sizes = [8, 32], strides = [1, 1]} : vector<8x128xf32> to vector<8x32xf32>
    %345 = vector.extract_strided_slice %343 {offsets = [0, 32], sizes = [8, 32], strides = [1, 1]} : vector<8x128xf32> to vector<8x32xf32>
    %346 = vector.extract_strided_slice %343 {offsets = [0, 64], sizes = [8, 32], strides = [1, 1]} : vector<8x128xf32> to vector<8x32xf32>
    %347 = vector.extract_strided_slice %343 {offsets = [0, 96], sizes = [8, 32], strides = [1, 1]} : vector<8x128xf32> to vector<8x32xf32>
    %348 = arith.mulf %345, %330 : vector<8x32xf32>
    %349 = arith.mulf %344, %346 : vector<8x32xf32>
    %350 = arith.addf %348, %349 : vector<8x32xf32>
    %351 = math.tanh %350 : vector<8x32xf32>
    %352 = arith.mulf %347, %351 : vector<8x32xf32>
    %353 = vector.extract_strided_slice %208 {offsets = [56, 0], sizes = [8, 128], strides = [1, 1]} : vector<64x128xf32> to vector<8x128xf32>
    %354 = arith.truncf %352 : vector<8x32xf32> to vector<8x32xbf16>
    %cst_79 = arith.constant dense<0.000000e+00> : vector<8x128xf32>
    %355 = tpu.matmul %354, %202, %cst_79 {dimension_numbers = #tpu.dot_dimension_numbers<[1], [0], [0], [1], [0, 0, 1, 1], [], []>} : vector<8x32xbf16>, vector<32x128xbf16>, vector<8x128xf32> -> vector<8x128xf32>
    %356 = arith.addf %353, %355 : vector<8x128xf32>
    %357 = arith.negf %356 : vector<8x128xf32>
    %358 = math.exp %357 : vector<8x128xf32>
    %cst_80 = arith.constant 1.000000e+00 : f32
    %359 = vector.broadcast %cst_80 : f32 to vector<8x128xf32>
    %360 = arith.addf %359, %358 : vector<8x128xf32>
    %361 = arith.divf %359, %360 : vector<8x128xf32>
    %362 = math.tanh %356 : vector<8x128xf32>
    %363 = arith.select %15, %362, %361 : vector<8x128xi1>, vector<8x128xf32>
    %364 = vector.extract_strided_slice %363 {offsets = [0, 0], sizes = [8, 32], strides = [1, 1]} : vector<8x128xf32> to vector<8x32xf32>
    %365 = vector.extract_strided_slice %363 {offsets = [0, 32], sizes = [8, 32], strides = [1, 1]} : vector<8x128xf32> to vector<8x32xf32>
    %366 = vector.extract_strided_slice %363 {offsets = [0, 64], sizes = [8, 32], strides = [1, 1]} : vector<8x128xf32> to vector<8x32xf32>
    %367 = vector.extract_strided_slice %363 {offsets = [0, 96], sizes = [8, 32], strides = [1, 1]} : vector<8x128xf32> to vector<8x32xf32>
    %368 = arith.mulf %365, %350 : vector<8x32xf32>
    %369 = arith.mulf %364, %366 : vector<8x32xf32>
    %370 = arith.addf %368, %369 : vector<8x32xf32>
    %371 = math.tanh %370 : vector<8x32xf32>
    %372 = arith.mulf %367, %371 : vector<8x32xf32>
    %c1_81 = arith.constant 1 : index
    %c0_82 = arith.constant 0 : index
    %c0_83 = arith.constant 0 : index
    %373 = vector.load %arg15[%c1_81, %c0_82, %c0_83] : memref<2x8x32xf32, #tpu.memory_space<vmem>>, vector<1x8x32xf32>
    %374 = vector.shape_cast %373 : vector<1x8x32xf32> to vector<8x32xf32>
    %375 = vector.shape_cast %372 : vector<8x32xf32> to vector<1x8x32xf32>
    tpu.vector_store %arg15[%c1_81, %c0_82, %c0_83], %375 {strides = array<i32>} : memref<2x8x32xf32, #tpu.memory_space<vmem>>, vector<1x8x32xf32>,
    %c1_84 = arith.constant 1 : index
    %c0_85 = arith.constant 0 : index
    %c0_86 = arith.constant 0 : index
    %376 = vector.load %arg16[%c1_84, %c0_85, %c0_86] : memref<2x8x32xf32, #tpu.memory_space<vmem>>, vector<1x8x32xf32>
    %377 = vector.shape_cast %376 : vector<1x8x32xf32> to vector<8x32xf32>
    %378 = vector.shape_cast %370 : vector<8x32xf32> to vector<1x8x32xf32>
    tpu.vector_store %arg16[%c1_84, %c0_85, %c0_86], %378 {strides = array<i32>} : memref<2x8x32xf32, #tpu.memory_space<vmem>>, vector<1x8x32xf32>,
    %379 = arith.truncf %372 : vector<8x32xf32> to vector<8x32xbf16>
    %c0_87 = arith.constant 0 : index
    %c0_88 = arith.constant 0 : index
    %380 = vector.load %arg12[%c0_87, %c0_88] : memref<32x128xbf16, #tpu.memory_space<vmem>>, vector<32x128xbf16>
    %cst_89 = arith.constant dense<0.000000e+00> : vector<8x128xf32>
    %381 = tpu.matmul %379, %380, %cst_89 {dimension_numbers = #tpu.dot_dimension_numbers<[1], [0], [0], [1], [0, 0, 1, 1], [], []>} : vector<8x32xbf16>, vector<32x128xbf16>, vector<8x128xf32> -> vector<8x128xf32>
    %c0_90 = arith.constant 0 : index
    %c0_91 = arith.constant 0 : index
    %382 = vector.load %arg13[%c0_90, %c0_91] : memref<1x128xf32, #tpu.memory_space<vmem>>, vector<1x128xf32>
    %383 = vector.broadcast %382 : vector<1x128xf32> to vector<8x128xf32>
    %384 = arith.addf %381, %383 : vector<8x128xf32>
    %c0_92 = arith.constant 0 : index
    %c0_93 = arith.constant 0 : index
    %385 = vector.load %arg14[%c0_92, %c0_93] : memref<8x128xf32, #tpu.memory_space<vmem>>, vector<8x128xf32>
    tpu.vector_store %arg14[%c0_92, %c0_93], %384 {strides = array<i32>} : memref<8x128xf32, #tpu.memory_space<vmem>>, vector<8x128xf32>,
    return
  }
  func.func @transform_0(%arg0: i32) -> (i32, i32, i32) {
    %c0_i32 = arith.constant 0 : i32
    %c0_i32_0 = arith.constant 0 : i32
    %c0_i32_1 = arith.constant 0 : i32
    return %c0_i32, %arg0, %c0_i32_0 : i32, i32, i32
  }
  func.func @transform_1(%arg0: i32) -> (i32, i32, i32) {
    %c0_i32 = arith.constant 0 : i32
    %c0_i32_0 = arith.constant 0 : i32
    %c0_i32_1 = arith.constant 0 : i32
    return %c0_i32, %arg0, %c0_i32_0 : i32, i32, i32
  }
  func.func @transform_2(%arg0: i32) -> (i32, i32, i32) {
    %c0_i32 = arith.constant 0 : i32
    %c0_i32_0 = arith.constant 0 : i32
    %c0_i32_1 = arith.constant 0 : i32
    return %c0_i32, %arg0, %c0_i32_0 : i32, i32, i32
  }
  func.func @transform_3(%arg0: i32) -> (i32, i32) {
    %c0_i32 = arith.constant 0 : i32
    %c0_i32_0 = arith.constant 0 : i32
    %c0_i32_1 = arith.constant 0 : i32
    return %c0_i32, %c0_i32_0 : i32, i32
  }
  func.func @transform_4(%arg0: i32) -> (i32, i32) {
    %c0_i32 = arith.constant 0 : i32
    %c0_i32_0 = arith.constant 0 : i32
    %c0_i32_1 = arith.constant 0 : i32
    return %c0_i32, %c0_i32_0 : i32, i32
  }
  func.func @transform_5(%arg0: i32) -> (i32, i32) {
    %c0_i32 = arith.constant 0 : i32
    %c0_i32_0 = arith.constant 0 : i32
    %c0_i32_1 = arith.constant 0 : i32
    return %c0_i32, %c0_i32_0 : i32, i32
  }
  func.func @transform_6(%arg0: i32) -> (i32, i32) {
    %c0_i32 = arith.constant 0 : i32
    %c0_i32_0 = arith.constant 0 : i32
    %c0_i32_1 = arith.constant 0 : i32
    return %c0_i32, %c0_i32_0 : i32, i32
  }
  func.func @transform_7(%arg0: i32) -> (i32, i32) {
    %c0_i32 = arith.constant 0 : i32
    %c0_i32_0 = arith.constant 0 : i32
    %c0_i32_1 = arith.constant 0 : i32
    return %c0_i32, %c0_i32_0 : i32, i32
  }
  func.func @transform_8(%arg0: i32) -> (i32, i32) {
    %c0_i32 = arith.constant 0 : i32
    %c0_i32_0 = arith.constant 0 : i32
    %c0_i32_1 = arith.constant 0 : i32
    return %c0_i32, %c0_i32_0 : i32, i32
  }
  func.func @transform_9(%arg0: i32) -> (i32, i32) {
    %c0_i32 = arith.constant 0 : i32
    %c0_i32_0 = arith.constant 0 : i32
    %c0_i32_1 = arith.constant 0 : i32
    return %c0_i32, %c0_i32_0 : i32, i32
  }
  func.func @transform_10(%arg0: i32) -> (i32, i32) {
    %c0_i32 = arith.constant 0 : i32
    %c0_i32_0 = arith.constant 0 : i32
    %c0_i32_1 = arith.constant 0 : i32
    return %c0_i32, %c0_i32_0 : i32, i32
  }
  func.func @transform_11(%arg0: i32) -> (i32, i32) {
    %c0_i32 = arith.constant 0 : i32
    %c0_i32_0 = arith.constant 0 : i32
    %c0_i32_1 = arith.constant 0 : i32
    return %c0_i32, %c0_i32_0 : i32, i32
  }
  func.func @transform_12(%arg0: i32) -> (i32, i32) {
    %c0_i32 = arith.constant 0 : i32
    %c0_i32_0 = arith.constant 0 : i32
    %c0_i32_1 = arith.constant 0 : i32
    return %c0_i32, %c0_i32_0 : i32, i32
  }
  func.func @transform_13(%arg0: i32) -> (i32, i32) {
    %c0_i32 = arith.constant 0 : i32
    %c0_i32_0 = arith.constant 0 : i32
    return %arg0, %c0_i32 : i32, i32
  }
  func.func @transform_14(%arg0: i32) -> (i32, i32, i32) {
    %c0_i32 = arith.constant 0 : i32
    %c0_i32_0 = arith.constant 0 : i32
    %c0_i32_1 = arith.constant 0 : i32
    return %c0_i32, %arg0, %c0_i32_0 : i32, i32, i32
  }
  func.func @transform_15(%arg0: i32) -> (i32, i32, i32) {
    %c0_i32 = arith.constant 0 : i32
    %c0_i32_0 = arith.constant 0 : i32
    %c0_i32_1 = arith.constant 0 : i32
    return %c0_i32, %arg0, %c0_i32_0 : i32, i32, i32
  }
}

</mosaic_0001>

<llo_original>
// kernel: lstm_predictor_forward.1
$region0: #{lstm_predictor_forward.1}
  #allocation0 [shape = 'u32[]', space=smem, size = 0x4, offset = 0x4, fixed_abs, tag = 'smem constant byte address 0x4 - core index']
  #allocation1 [shape = 'u32[144,128]{1,0:T(1,128)}', space=vmem, size = 0x12000, scoped, tag = 'internal scratch']
  #allocation2 [shape = 'f32[64,32]{1,0:T(8,128)}', space=vmem, size = 0x8000, scoped, tag = 'scratch operand']
  %s0 = inlined_call_operand.vmem [shape: f32[8,8,4], index: 0, kind: input, shape index: {}]
  %s1 = inlined_call_operand.vmem [shape: f32[2,8,32], index: 1, kind: input, shape index: {}]
  %s2 = inlined_call_operand.vmem [shape: f32[2,8,32], index: 2, kind: input, shape index: {}]
  %s3 = inlined_call_operand.vmem [shape: bf16[4,16], index: 3, kind: input, shape index: {}]
  %s4 = inlined_call_operand.vmem [shape: f32[1,16], index: 4, kind: input, shape index: {}]
  %s5 = inlined_call_operand.vmem [shape: bf16[16,128], index: 5, kind: input, shape index: {}]
  %s6 = inlined_call_operand.vmem [shape: bf16[32,128], index: 6, kind: input, shape index: {}]
  %s7 = inlined_call_operand.vmem [shape: f32[1,128], index: 7, kind: input, shape index: {}]
  %s8 = inlined_call_operand.vmem [shape: bf16[32,128], index: 8, kind: input, shape index: {}]
  %s9 = inlined_call_operand.vmem [shape: bf16[32,128], index: 9, kind: input, shape index: {}]
  %s10 = inlined_call_operand.vmem [shape: f32[1,128], index: 10, kind: input, shape index: {}]
  %s11 = inlined_call_operand.vmem [shape: bf16[32,128], index: 11, kind: input, shape index: {}]
  %s12 = inlined_call_operand.vmem [shape: f32[1,128], index: 12, kind: input, shape index: {}]
  %s13 = inlined_call_operand.vmem [shape: f32[8,128], index: 13, kind: output, shape index: {0}]
  %s14 = inlined_call_operand.vmem [shape: f32[2,8,32], index: 14, kind: output, shape index: {1}]
  %s15 = inlined_call_operand.vmem [shape: f32[2,8,32], index: 15, kind: output, shape index: {2}]
  %16 = xla_tuple %s13, %s14, %s15
  %s17 = sld [smem:[#allocation0]]
  $region78: #{lstm_predictor_forward.1} parent=0
    _
  %s19 = ssub.s32 1, %s17
  %s20 = scalar_select 0, %s19, %s17
  // Predicated region
  $region2: #{lstm_predictor_forward.1} parent=0 // pred_check
    _
  $region3: #{lstm_predictor_forward.1} parent=0 // pred_check_branch
    %22 = sbr.rel (0) target = $region5
  $region4: #{lstm_predictor_forward.1} parent=0 // pred_region
    _
  $region5: #{lstm_predictor_forward.1} parent=0 // pred_fallthru
    _
  // Predicated region
  $region6: #{lstm_predictor_forward.1} parent=0 // pred_check
    _
  $region7: #{lstm_predictor_forward.1} parent=0 // pred_check_branch
    %24 = sbr.rel (0) target = $region9
  $region8: #{lstm_predictor_forward.1} parent=0 // pred_region
    _
  $region9: #{lstm_predictor_forward.1} parent=0 // pred_fallthru
    _
  // Predicated region
  $region10: #{lstm_predictor_forward.1} parent=0 // pred_check
    _
  $region11: #{lstm_predictor_forward.1} parent=0 // pred_check_branch
    %26 = sbr.rel (0) target = $region13
  $region12: #{lstm_predictor_forward.1} parent=0 // pred_region
    _
  $region13: #{lstm_predictor_forward.1} parent=0 // pred_fallthru
    _
  // Predicated region
  $region14: #{lstm_predictor_forward.1} parent=0 // pred_check
    _
  $region15: #{lstm_predictor_forward.1} parent=0 // pred_check_branch
    %28 = sbr.rel (0) target = $region17
  $region16: #{lstm_predictor_forward.1} parent=0 // pred_region
    _
  $region17: #{lstm_predictor_forward.1} parent=0 // pred_fallthru
    _
  // Predicated region
  $region18: #{lstm_predictor_forward.1} parent=0 // pred_check
    _
  $region19: #{lstm_predictor_forward.1} parent=0 // pred_check_branch
    %30 = sbr.rel (0) target = $region21
  $region20: #{lstm_predictor_forward.1} parent=0 // pred_region
    _
  $region21: #{lstm_predictor_forward.1} parent=0 // pred_fallthru
    _
  // Predicated region
  $region22: #{lstm_predictor_forward.1} parent=0 // pred_check
    _
  $region23: #{lstm_predictor_forward.1} parent=0 // pred_check_branch
    %32 = sbr.rel (0) target = $region25
  $region24: #{lstm_predictor_forward.1} parent=0 // pred_region
    _
  $region25: #{lstm_predictor_forward.1} parent=0 // pred_fallthru
    _
  // Predicated region
  $region26: #{lstm_predictor_forward.1} parent=0 // pred_check
    _
  $region27: #{lstm_predictor_forward.1} parent=0 // pred_check_branch
    %34 = sbr.rel (0) target = $region29
  $region28: #{lstm_predictor_forward.1} parent=0 // pred_region
    _
  $region29: #{lstm_predictor_forward.1} parent=0 // pred_fallthru
    _
  // Predicated region
  $region30: #{lstm_predictor_forward.1} parent=0 // pred_check
    _
  $region31: #{lstm_predictor_forward.1} parent=0 // pred_check_branch
    %36 = sbr.rel (0) target = $region33
  $region32: #{lstm_predictor_forward.1} parent=0 // pred_region
    _
  $region33: #{lstm_predictor_forward.1} parent=0 // pred_fallthru
    _
  // Predicated region
  $region34: #{lstm_predictor_forward.1} parent=0 // pred_check
    _
  $region35: #{lstm_predictor_forward.1} parent=0 // pred_check_branch
    %38 = sbr.rel (0) target = $region37
  $region36: #{lstm_predictor_forward.1} parent=0 // pred_region
    _
  $region37: #{lstm_predictor_forward.1} parent=0 // pred_fallthru
    _
  // Predicated region
  $region38: #{lstm_predictor_forward.1} parent=0 // pred_check
    _
  $region39: #{lstm_predictor_forward.1} parent=0 // pred_check_branch
    %40 = sbr.rel (0) target = $region41
  $region40: #{lstm_predictor_forward.1} parent=0 // pred_region
    _
  $region41: #{lstm_predictor_forward.1} parent=0 // pred_fallthru
    _
  // Predicated region
  $region42: #{lstm_predictor_forward.1} parent=0 // pred_check
    _
  $region43: #{lstm_predictor_forward.1} parent=0 // pred_check_branch
    %42 = sbr.rel (0) target = $region45
  $region44: #{lstm_predictor_forward.1} parent=0 // pred_region
    _
  $region45: #{lstm_predictor_forward.1} parent=0 // pred_fallthru
    _
  // Predicated region
  $region46: #{lstm_predictor_forward.1} parent=0 // pred_check
    _
  $region47: #{lstm_predictor_forward.1} parent=0 // pred_check_branch
    %44 = sbr.rel (0) target = $region49
  $region48: #{lstm_predictor_forward.1} parent=0 // pred_region
    _
  $region49: #{lstm_predictor_forward.1} parent=0 // pred_fallthru
    _
  // Predicated region
  $region50: #{lstm_predictor_forward.1} parent=0 // pred_check
    _
  $region51: #{lstm_predictor_forward.1} parent=0 // pred_check_branch
    %46 = sbr.rel (0) target = $region53
  $region52: #{lstm_predictor_forward.1} parent=0 // pred_region
    _
  $region53: #{lstm_predictor_forward.1} parent=0 // pred_fallthru
    _
  %v48 = vld [vmem:[%s0] sm:$0xff]
  %v49 = vld [vmem:[%s0 + $0x8] sm:$0xff]
  %v50 = vld [vmem:[%s0 + $0x10] sm:$0xff]
  %v51 = vld [vmem:[%s0 + $0x18] sm:$0xff]
  %v52 = vld [vmem:[%s0 + $0x20] sm:$0xff]
  %v53 = vld [vmem:[%s0 + $0x28] sm:$0xff]
  %v54 = vld [vmem:[%s0 + $0x30] sm:$0xff]
  %v55 = vld [vmem:[%s0 + $0x38] sm:$0xff]
  %v56 = vpack.c.bf16 %v49, %v48
  %v57 = vpack.c.bf16 %v51, %v50
  %v58 = vpack.c.bf16 %v53, %v52
  %v59 = vpack.c.bf16 %v55, %v54
  %v60 = vld [vmem:[%s3] sm:$0x3]
  %v61 = vld [vmem:[%s4] sm:$0x1]
  %v63 = vlaneseq
  %v64 = vshrl.u32 %v63, 7
  %v65 = vsub.s32 0, %v64
  %v66 = vrot.slane %v61, %v65
  %vm68 = vcmask 31744
  %v70 = vsel %vm68, %v56, 0
  %v73 = vsel %vm68, %v57, 0
  %v76 = vsel %vm68, %v58, 0
  %v79 = vsel %vm68, %v59, 0
  %vm81 = vcmask 1041408
  %v83 = vsel %vm81, %v60, 0
  %85 = vmatprep.subr.bf16.mxu0 0
  %86 = vmatpush1.bf16.msra.mxu0 0
  %87 = vmatprep.subr.bf16.mxu0 0
  %88 = vmatpush1.bf16.msra.mxu0 0
  %89 = vmatprep.subr.bf16.mxu0 0
  %90 = vmatpush1.bf16.msra.mxu0 0
  %91 = vmatprep.subr.bf16.mxu0 0
  %92 = vmatpush1.bf16.msra.mxu0 0
  %93 = vmatprep.subr.bf16.mxu0 0
  %94 = vmatpush1.bf16.msra.mxu0 0
  %95 = vmatprep.subr.bf16.mxu0 0
  %96 = vmatpush1.bf16.msra.mxu0 0
  %97 = vmatprep.subr.bf16.mxu0 0
  %98 = vmatpush1.bf16.msra.mxu0 0
  %99 = vmatprep.subr.bf16.mxu0 0
  %100 = vmatpush1.bf16.msra.mxu0 %v83
  %101 = vmatprep.subr.bf16.mxu0 0
  %102 = vmatpush2.bf16.msra.mxu0 0
  %103 = vmatprep.subr.bf16.mxu0 0
  %104 = vmatpush2.bf16.msra.mxu0 0
  %105 = vmatprep.subr.bf16.mxu0 0
  %106 = vmatpush2.bf16.msra.mxu0 0
  %107 = vmatprep.subr.bf16.mxu0 0
  %108 = vmatpush2.bf16.msra.mxu0 0
  %109 = vmatprep.subr.bf16.mxu0 0
  %110 = vmatpush2.bf16.msra.mxu0 0
  %111 = vmatprep.subr.bf16.mxu0 0
  %112 = vmatpush2.bf16.msra.mxu0 0
  %113 = vmatprep.subr.bf16.mxu0 0
  %114 = vmatpush2.bf16.msra.mxu0 0
  %115 = vmatprep.subr.bf16.mxu0 0
  %116 = vmatpush2.bf16.msra.mxu0 0
  %117 = vmatprep.mubr.bf16.mxu0 0
  %118 = vmatmul.mubr.bf16.gmra.mxu0 %v70
  %v119 = vpop.f32.mrf.mxu0
  %v120 = vadd.f32 %v66, %v119
  %v121 = vpop.f32.mrf.mxu0
  %v122 = vpop.f32.mrf.mxu0
  %v123 = vadd.f32 %v66, %v122
  %v124 = vpop.f32.mrf.mxu0
  %125 = vmatprep.mubr.bf16.mxu0 0
  %126 = vmatmul.mubr.bf16.gmra.mxu0 %v73
  %v127 = vpop.f32.mrf.mxu0
  %v128 = vadd.f32 %v66, %v127
  %v129 = vpop.f32.mrf.mxu0
  %v130 = vpop.f32.mrf.mxu0
  %v131 = vadd.f32 %v66, %v130
  %v132 = vpop.f32.mrf.mxu0
  %133 = vmatprep.mubr.bf16.mxu0 0
  %134 = vmatmul.mubr.bf16.gmra.mxu0 %v76
  %v135 = vpop.f32.mrf.mxu0
  %v136 = vadd.f32 %v66, %v135
  %v137 = vpop.f32.mrf.mxu0
  %v138 = vpop.f32.mrf.mxu0
  %v139 = vadd.f32 %v66, %v138
  %v140 = vpop.f32.mrf.mxu0
  %141 = vmatprep.mubr.bf16.mxu0 0
  %142 = vmatmul.mubr.bf16.gmra.mxu0 %v79
  %v143 = vpop.f32.mrf.mxu0
  %v144 = vadd.f32 %v66, %v143
  %v145 = vpop.f32.mrf.mxu0
  %v146 = vpop.f32.mrf.mxu0
  %v147 = vadd.f32 %v66, %v146
  %v148 = vpop.f32.mrf.mxu0
  %149 = vdwg.mxu0
  %v150 = vmax.f32 %v120, 0.0
  %v151 = vmax.f32 %v123, 0.0
  %v152 = vmax.f32 %v128, 0.0
  %v153 = vmax.f32 %v131, 0.0
  %v154 = vmax.f32 %v136, 0.0
  %v155 = vmax.f32 %v139, 0.0
  %v156 = vmax.f32 %v144, 0.0
  %v157 = vmax.f32 %v147, 0.0
  %v158 = vlaneseq
  %v159 = vand.u32 %v158, 127
  %vm160 = vcmp.ge.s32.totalorder %v159, 64
  %vm161 = vcmp.lt.s32.totalorder %v159, 96
  %vm162 = vmand %vm160, %vm161
  %v163 = vld [vmem:[%s6] sm:$0xf]
  %v164 = vld [vmem:[%s6 + $0x4] sm:$0xf]
  %v165 = vld [vmem:[%s6 + $0x8] sm:$0xf]
  %v166 = vld [vmem:[%s6 + $0xc] sm:$0xf]
  %v167 = vpack.c.bf16 %v151, %v150
  %v168 = vpack.c.bf16 %v153, %v152
  %v169 = vpack.c.bf16 %v155, %v154
  %v170 = vpack.c.bf16 %v157, %v156
  %v171 = vld [vmem:[%s5] sm:$0xf]
  %v172 = vld [vmem:[%s5 + $0x4] sm:$0xf]
  %v173 = vld [vmem:[%s7] sm:$0x1]
  %v175 = vlaneseq
  %v176 = vshrl.u32 %v175, 7
  %v177 = vsub.s32 0, %v176
  %v178 = vrot.slane %v173, %v177
  %v182 = vunpack.c.l.b16 %v171
  %v183 = vunpack.c.l.b16 %v172
  %v184 = vpack.c.b16 %v183, %v182
  %vm186 = vcmask 130048
  %v188 = vsel %vm186, %v167, 0
  %v191 = vsel %vm186, %v168, 0
  %v194 = vsel %vm186, %v169, 0
  %v197 = vsel %vm186, %v170, 0
  %199 = vmatprep.subr.bf16.mxu0 0
  %200 = vmatpush1.bf16.msra.mxu0 0
  %201 = vmatprep.subr.bf16.mxu0 0
  %202 = vmatpush1.bf16.msra.mxu0 0
  %203 = vmatprep.subr.bf16.mxu0 0
  %204 = vmatpush1.bf16.msra.mxu0 0
  %205 = vmatprep.subr.bf16.mxu0 0
  %206 = vmatpush1.bf16.msra.mxu0 0
  %207 = vmatprep.subr.bf16.mxu0 0
  %208 = vmatpush1.bf16.msra.mxu0 0
  %209 = vmatprep.subr.bf16.mxu0 0
  %210 = vmatpush1.bf16.msra.mxu0 0
  %211 = vmatprep.subr.bf16.mxu0 0
  %212 = vmatpush1.bf16.msra.mxu0 0
  %213 = vmatprep.subr.bf16.mxu0 0
  %214 = vmatpush1.bf16.msra.mxu0 %v184
  %215 = vmatprep.subr.bf16.mxu0 0
  %216 = vmatpush2.bf16.msra.mxu0 0
  %217 = vmatprep.subr.bf16.mxu0 0
  %218 = vmatpush2.bf16.msra.mxu0 0
  %219 = vmatprep.subr.bf16.mxu0 0
  %220 = vmatpush2.bf16.msra.mxu0 0
  %221 = vmatprep.subr.bf16.mxu0 0
  %222 = vmatpush2.bf16.msra.mxu0 0
  %223 = vmatprep.subr.bf16.mxu0 0
  %224 = vmatpush2.bf16.msra.mxu0 0
  %225 = vmatprep.subr.bf16.mxu0 0
  %226 = vmatpush2.bf16.msra.mxu0 0
  %227 = vmatprep.subr.bf16.mxu0 0
  %228 = vmatpush2.bf16.msra.mxu0 0
  %229 = vmatprep.subr.bf16.mxu0 0
  %230 = vmatpush2.bf16.msra.mxu0 0
  %231 = vmatprep.mubr.bf16.mxu0 0
  %232 = vmatmul.mubr.bf16.gmra.mxu0 %v188
  %v233 = vpop.f32.mrf.mxu0
  %v234 = vadd.f32 %v178, %v233
  %v235 = vpop.f32.mrf.mxu0
  %v236 = vpop.f32.mrf.mxu0
  %v237 = vadd.f32 %v178, %v236
  %v238 = vpop.f32.mrf.mxu0
  %239 = vmatprep.mubr.bf16.mxu0 0
  %240 = vmatmul.mubr.bf16.gmra.mxu0 %v191
  %v241 = vpop.f32.mrf.mxu0
  %v242 = vadd.f32 %v178, %v241
  %v243 = vpop.f32.mrf.mxu0
  %v244 = vpop.f32.mrf.mxu0
  %v245 = vadd.f32 %v178, %v244
  %v246 = vpop.f32.mrf.mxu0
  %247 = vmatprep.mubr.bf16.mxu0 0
  %248 = vmatmul.mubr.bf16.gmra.mxu0 %v194
  %v249 = vpop.f32.mrf.mxu0
  %v250 = vadd.f32 %v178, %v249
  %v251 = vpop.f32.mrf.mxu0
  %v252 = vpop.f32.mrf.mxu0
  %v253 = vadd.f32 %v178, %v252
  %v254 = vpop.f32.mrf.mxu0
  %255 = vmatprep.mubr.bf16.mxu0 0
  %256 = vmatmul.mubr.bf16.gmra.mxu0 %v197
  %v257 = vpop.f32.mrf.mxu0
  %v258 = vadd.f32 %v178, %v257
  %v259 = vpop.f32.mrf.mxu0
  %v260 = vpop.f32.mrf.mxu0
  %v261 = vadd.f32 %v178, %v260
  %v262 = vpop.f32.mrf.mxu0
  %263 = vdwg.mxu0
  %v264 = vld [vmem:[%s1] sm:$0xff]
  %v265 = vld [vmem:[%s2] sm:$0xff]
  %v266 = vpack.c.bf16 %v264, %v264
  %v271 = vunpack.c.l.b16 %v163
  %v272 = vunpack.c.l.b16 %v164
  %v273 = vunpack.c.l.b16 %v165
  %v274 = vunpack.c.l.b16 %v166
  %v275 = vpack.c.b16 %v272, %v271
  %v276 = vpack.c.b16 %v274, %v273
  %vm279 = vcmask 261120
  %v281 = vsel %vm279, %v266, 0
  %283 = vmatprep.subr.bf16.mxu0 0
  %284 = vmatpush1.bf16.msra.mxu0 0
  %285 = vmatprep.subr.bf16.mxu0 0
  %286 = vmatpush1.bf16.msra.mxu0 0
  %287 = vmatprep.subr.bf16.mxu0 0
  %288 = vmatpush1.bf16.msra.mxu0 0
  %289 = vmatprep.subr.bf16.mxu0 0
  %290 = vmatpush1.bf16.msra.mxu0 0
  %291 = vmatprep.subr.bf16.mxu0 0
  %292 = vmatpush1.bf16.msra.mxu0 0
  %293 = vmatprep.subr.bf16.mxu0 0
  %294 = vmatpush1.bf16.msra.mxu0 0
  %295 = vmatprep.subr.bf16.mxu0 0
  %296 = vmatpush1.bf16.msra.mxu0 %v276
  %297 = vmatprep.subr.bf16.mxu0 0
  %298 = vmatpush1.bf16.msra.mxu0 %v275
  %299 = vmatprep.subr.bf16.mxu0 0
  %300 = vmatpush2.bf16.msra.mxu0 0
  %301 = vmatprep.subr.bf16.mxu0 0
  %302 = vmatpush2.bf16.msra.mxu0 0
  %303 = vmatprep.subr.bf16.mxu0 0
  %304 = vmatpush2.bf16.msra.mxu0 0
  %305 = vmatprep.subr.bf16.mxu0 0
  %306 = vmatpush2.bf16.msra.mxu0 0
  %307 = vmatprep.subr.bf16.mxu0 0
  %308 = vmatpush2.bf16.msra.mxu0 0
  %309 = vmatprep.subr.bf16.mxu0 0
  %310 = vmatpush2.bf16.msra.mxu0 0
  %311 = vmatprep.subr.bf16.mxu0 0
  %312 = vmatpush2.bf16.msra.mxu0 0
  %313 = vmatprep.subr.bf16.mxu0 0
  %314 = vmatpush2.bf16.msra.mxu0 0
  %315 = vmatprep.mubr.bf16.mxu0 0
  %316 = vmatmul.mubr.bf16.gmra.mxu0 %v281
  %v317 = vpop.f32.mrf.mxu0
  %v318 = vadd.f32 0.0, %v317
  %v319 = vpop.f32.mrf.mxu0
  %v320 = vpop.f32.mrf.mxu0
  %v321 = vpop.f32.mrf.mxu0
  %322 = vdwg.mxu0
  %v323 = vadd.f32 %v234, %v318
  %v324 = vxor.u32 %v323, 2147483648
  %v325 = vmul.f32 %v324, 1.442695
  %v326 = vpow.pop %v325
  %v327 = vadd.f32 %v326, 1.0
  %v328 = vrcp.pop %v327
  %v329 = vmul.f32 1.0, %v328
  %v330 = vtanh.pop %v323
  %v331 = vsel %vm162, %v330, %v329
  %333 = vrot.lane.b32.xlu0 %v265, 32
  %v334 = vpop.permute.xlu0 %333
  %v336 = vmul.f32 %v331, %v334
  %338 = vrot.lane.b32.xlu0 %v331, 64
  %v339 = vpop.permute.xlu0 %338
  %v341 = vmul.f32 %v331, %v339
  %343 = vrot.lane.b32.xlu0 %v341, 32
  %v344 = vpop.permute.xlu0 %343
  %v346 = vadd.f32 %v336, %v344
  %v347 = vtanh.pop %v346
  %349 = vrot.lane.b32.xlu0 %v347, 64
  %v350 = vpop.permute.xlu0 %349
  %v352 = vmul.f32 %v331, %v350
  %354 = vrot.lane.b32.xlu0 %v352, 32
  %v355 = vpop.permute.xlu0 %354
  %357 = vst.msk [vmem:[#allocation2] sm:$0xff] %vm279, %v355
  %v358 = vpack.c.bf16 %v352, %v352
  %360 = vrot.lane.b32.xlu0 %v358, 32
  %v361 = vpop.permute.xlu0 %360
  %v363 = vsel %vm279, %v361, 0
  %365 = vmatprep.subr.bf16.mxu0 0
  %366 = vmatpush1.bf16.msra.mxu0 0
  %367 = vmatprep.subr.bf16.mxu0 0
  %368 = vmatpush1.bf16.msra.mxu0 0
  %369 = vmatprep.subr.bf16.mxu0 0
  %370 = vmatpush1.bf16.msra.mxu0 0
  %371 = vmatprep.subr.bf16.mxu0 0
  %372 = vmatpush1.bf16.msra.mxu0 0
  %373 = vmatprep.subr.bf16.mxu0 0
  %374 = vmatpush1.bf16.msra.mxu0 0
  %375 = vmatprep.subr.bf16.mxu0 0
  %376 = vmatpush1.bf16.msra.mxu0 0
  %377 = vmatprep.subr.bf16.mxu0 0
  %378 = vmatpush1.bf16.msra.mxu0 %v276
  %379 = vmatprep.subr.bf16.mxu0 0
  %380 = vmatpush1.bf16.msra.mxu0 %v275
  %381 = vmatprep.subr.bf16.mxu0 0
  %382 = vmatpush2.bf16.msra.mxu0 0
  %383 = vmatprep.subr.bf16.mxu0 0
  %384 = vmatpush2.bf16.msra.mxu0 0
  %385 = vmatprep.subr.bf16.mxu0 0
  %386 = vmatpush2.bf16.msra.mxu0 0
  %387 = vmatprep.subr.bf16.mxu0 0
  %388 = vmatpush2.bf16.msra.mxu0 0
  %389 = vmatprep.subr.bf16.mxu0 0
  %390 = vmatpush2.bf16.msra.mxu0 0
  %391 = vmatprep.subr.bf16.mxu0 0
  %392 = vmatpush2.bf16.msra.mxu0 0
  %393 = vmatprep.subr.bf16.mxu0 0
  %394 = vmatpush2.bf16.msra.mxu0 0
  %395 = vmatprep.subr.bf16.mxu0 0
  %396 = vmatpush2.bf16.msra.mxu0 0
  %397 = vmatprep.mubr.bf16.mxu0 0
  %398 = vmatmul.mubr.bf16.gmra.mxu0 %v363
  %v399 = vpop.f32.mrf.mxu0
  %v400 = vadd.f32 0.0, %v399
  %v401 = vpop.f32.mrf.mxu0
  %v402 = vpop.f32.mrf.mxu0
  %v403 = vpop.f32.mrf.mxu0
  %404 = vdwg.mxu0
  %v405 = vadd.f32 %v237, %v400
  %v406 = vxor.u32 %v405, 2147483648
  %v407 = vmul.f32 %v406, 1.442695
  %v408 = vpow.pop %v407
  %v409 = vadd.f32 %v408, 1.0
  %v410 = vrcp.pop %v409
  %v411 = vmul.f32 1.0, %v410
  %v412 = vtanh.pop %v405
  %v413 = vsel %vm162, %v412, %v411
  %v414 = vmul.f32 %v413, %v346
  %416 = vrot.lane.b32.xlu0 %v413, 64
  %v417 = vpop.permute.xlu0 %416
  %v419 = vmul.f32 %v413, %v417
  %421 = vrot.lane.b32.xlu0 %v419, 32
  %v422 = vpop.permute.xlu0 %421
  %v424 = vadd.f32 %v414, %v422
  %v425 = vtanh.pop %v424
  %427 = vrot.lane.b32.xlu0 %v425, 64
  %v428 = vpop.permute.xlu0 %427
  %v430 = vmul.f32 %v413, %v428
  %432 = vrot.lane.b32.xlu0 %v430, 32
  %v433 = vpop.permute.xlu0 %432
  %435 = vst.msk [vmem:[#allocation2 + $0x8] sm:$0xff] %vm279, %v433
  %v436 = vpack.c.bf16 %v430, %v430
  %438 = vrot.lane.b32.xlu0 %v436, 32
  %v439 = vpop.permute.xlu0 %438
  %v441 = vsel %vm279, %v439, 0
  %443 = vmatprep.subr.bf16.mxu0 0
  %444 = vmatpush1.bf16.msra.mxu0 0
  %445 = vmatprep.subr.bf16.mxu0 0
  %446 = vmatpush1.bf16.msra.mxu0 0
  %447 = vmatprep.subr.bf16.mxu0 0
  %448 = vmatpush1.bf16.msra.mxu0 0
  %449 = vmatprep.subr.bf16.mxu0 0
  %450 = vmatpush1.bf16.msra.mxu0 0
  %451 = vmatprep.subr.bf16.mxu0 0
  %452 = vmatpush1.bf16.msra.mxu0 0
  %453 = vmatprep.subr.bf16.mxu0 0
  %454 = vmatpush1.bf16.msra.mxu0 0
  %455 = vmatprep.subr.bf16.mxu0 0
  %456 = vmatpush1.bf16.msra.mxu0 %v276
  %457 = vmatprep.subr.bf16.mxu0 0
  %458 = vmatpush1.bf16.msra.mxu0 %v275
  %459 = vmatprep.subr.bf16.mxu0 0
  %460 = vmatpush2.bf16.msra.mxu0 0
  %461 = vmatprep.subr.bf16.mxu0 0
  %462 = vmatpush2.bf16.msra.mxu0 0
  %463 = vmatprep.subr.bf16.mxu0 0
  %464 = vmatpush2.bf16.msra.mxu0 0
  %465 = vmatprep.subr.bf16.mxu0 0
  %466 = vmatpush2.bf16.msra.mxu0 0
  %467 = vmatprep.subr.bf16.mxu0 0
  %468 = vmatpush2.bf16.msra.mxu0 0
  %469 = vmatprep.subr.bf16.mxu0 0
  %470 = vmatpush2.bf16.msra.mxu0 0
  %471 = vmatprep.subr.bf16.mxu0 0
  %472 = vmatpush2.bf16.msra.mxu0 0
  %473 = vmatprep.subr.bf16.mxu0 0
  %474 = vmatpush2.bf16.msra.mxu0 0
  %475 = vmatprep.mubr.bf16.mxu0 0
  %476 = vmatmul.mubr.bf16.gmra.mxu0 %v441
  %v477 = vpop.f32.mrf.mxu0
  %v478 = vadd.f32 0.0, %v477
  %v479 = vpop.f32.mrf.mxu0
  %v480 = vpop.f32.mrf.mxu0
  %v481 = vpop.f32.mrf.mxu0
  %482 = vdwg.mxu0
  %v483 = vadd.f32 %v242, %v478
  %v484 = vxor.u32 %v483, 2147483648
  %v485 = vmul.f32 %v484, 1.442695
  %v486 = vpow.pop %v485
  %v487 = vadd.f32 %v486, 1.0
  %v488 = vrcp.pop %v487
  %v489 = vmul.f32 1.0, %v488
  %v490 = vtanh.pop %v483
  %v491 = vsel %vm162, %v490, %v489
  %v492 = vmul.f32 %v491, %v424
  %494 = vrot.lane.b32.xlu0 %v491, 64
  %v495 = vpop.permute.xlu0 %494
  %v497 = vmul.f32 %v491, %v495
  %499 = vrot.lane.b32.xlu0 %v497, 32
  %v500 = vpop.permute.xlu0 %499
  %v502 = vadd.f32 %v492, %v500
  %v503 = vtanh.pop %v502
  %505 = vrot.lane.b32.xlu0 %v503, 64
  %v506 = vpop.permute.xlu0 %505
  %v508 = vmul.f32 %v491, %v506
  %510 = vrot.lane.b32.xlu0 %v508, 32
  %v511 = vpop.permute.xlu0 %510
  %513 = vst.msk [vmem:[#allocation2 + $0x10] sm:$0xff] %vm279, %v511
  %v514 = vpack.c.bf16 %v508, %v508
  %516 = vrot.lane.b32.xlu0 %v514, 32
  %v517 = vpop.permute.xlu0 %516
  %v519 = vsel %vm279, %v517, 0
  %521 = vmatprep.subr.bf16.mxu0 0
  %522 = vmatpush1.bf16.msra.mxu0 0
  %523 = vmatprep.subr.bf16.mxu0 0
  %524 = vmatpush1.bf16.msra.mxu0 0
  %525 = vmatprep.subr.bf16.mxu0 0
  %526 = vmatpush1.bf16.msra.mxu0 0
  %527 = vmatprep.subr.bf16.mxu0 0
  %528 = vmatpush1.bf16.msra.mxu0 0
  %529 = vmatprep.subr.bf16.mxu0 0
  %530 = vmatpush1.bf16.msra.mxu0 0
  %531 = vmatprep.subr.bf16.mxu0 0
  %532 = vmatpush1.bf16.msra.mxu0 0
  %533 = vmatprep.subr.bf16.mxu0 0
  %534 = vmatpush1.bf16.msra.mxu0 %v276
  %535 = vmatprep.subr.bf16.mxu0 0
  %536 = vmatpush1.bf16.msra.mxu0 %v275
  %537 = vmatprep.subr.bf16.mxu0 0
  %538 = vmatpush2.bf16.msra.mxu0 0
  %539 = vmatprep.subr.bf16.mxu0 0
  %540 = vmatpush2.bf16.msra.mxu0 0
  %541 = vmatprep.subr.bf16.mxu0 0
  %542 = vmatpush2.bf16.msra.mxu0 0
  %543 = vmatprep.subr.bf16.mxu0 0
  %544 = vmatpush2.bf16.msra.mxu0 0
  %545 = vmatprep.subr.bf16.mxu0 0
  %546 = vmatpush2.bf16.msra.mxu0 0
  %547 = vmatprep.subr.bf16.mxu0 0
  %548 = vmatpush2.bf16.msra.mxu0 0
  %549 = vmatprep.subr.bf16.mxu0 0
  %550 = vmatpush2.bf16.msra.mxu0 0
  %551 = vmatprep.subr.bf16.mxu0 0
  %552 = vmatpush2.bf16.msra.mxu0 0
  %553 = vmatprep.mubr.bf16.mxu0 0
  %554 = vmatmul.mubr.bf16.gmra.mxu0 %v519
  %v555 = vpop.f32.mrf.mxu0
  %v556 = vadd.f32 0.0, %v555
  %v557 = vpop.f32.mrf.mxu0
  %v558 = vpop.f32.mrf.mxu0
  %v559 = vpop.f32.mrf.mxu0
  %560 = vdwg.mxu0
  %v561 = vadd.f32 %v245, %v556
  %v562 = vxor.u32 %v561, 2147483648
  %v563 = vmul.f32 %v562, 1.442695
  %v564 = vpow.pop %v563
  %v565 = vadd.f32 %v564, 1.0
  %v566 = vrcp.pop %v565
  %v567 = vmul.f32 1.0, %v566
  %v568 = vtanh.pop %v561
  %v569 = vsel %vm162, %v568, %v567
  %v570 = vmul.f32 %v569, %v502
  %572 = vrot.lane.b32.xlu0 %v569, 64
  %v573 = vpop.permute.xlu0 %572
  %v575 = vmul.f32 %v569, %v573
  %577 = vrot.lane.b32.xlu0 %v575, 32
  %v578 = vpop.permute.xlu0 %577
  %v580 = vadd.f32 %v570, %v578
  %v581 = vtanh.pop %v580
  %583 = vrot.lane.b32.xlu0 %v581, 64
  %v584 = vpop.permute.xlu0 %583
  %v586 = vmul.f32 %v569, %v584
  %588 = vrot.lane.b32.xlu0 %v586, 32
  %v589 = vpop.permute.xlu0 %588
  %591 = vst.msk [vmem:[#allocation2 + $0x18] sm:$0xff] %vm279, %v589
  %v592 = vpack.c.bf16 %v586, %v586
  %594 = vrot.lane.b32.xlu0 %v592, 32
  %v595 = vpop.permute.xlu0 %594
  %v597 = vsel %vm279, %v595, 0
  %599 = vmatprep.subr.bf16.mxu0 0
  %600 = vmatpush1.bf16.msra.mxu0 0
  %601 = vmatprep.subr.bf16.mxu0 0
  %602 = vmatpush1.bf16.msra.mxu0 0
  %603 = vmatprep.subr.bf16.mxu0 0
  %604 = vmatpush1.bf16.msra.mxu0 0
  %605 = vmatprep.subr.bf16.mxu0 0
  %606 = vmatpush1.bf16.msra.mxu0 0
  %607 = vmatprep.subr.bf16.mxu0 0
  %608 = vmatpush1.bf16.msra.mxu0 0
  %609 = vmatprep.subr.bf16.mxu0 0
  %610 = vmatpush1.bf16.msra.mxu0 0
  %611 = vmatprep.subr.bf16.mxu0 0
  %612 = vmatpush1.bf16.msra.mxu0 %v276
  %613 = vmatprep.subr.bf16.mxu0 0
  %614 = vmatpush1.bf16.msra.mxu0 %v275
  %615 = vmatprep.subr.bf16.mxu0 0
  %616 = vmatpush2.bf16.msra.mxu0 0
  %617 = vmatprep.subr.bf16.mxu0 0
  %618 = vmatpush2.bf16.msra.mxu0 0
  %619 = vmatprep.subr.bf16.mxu0 0
  %620 = vmatpush2.bf16.msra.mxu0 0
  %621 = vmatprep.subr.bf16.mxu0 0
  %622 = vmatpush2.bf16.msra.mxu0 0
  %623 = vmatprep.subr.bf16.mxu0 0
  %624 = vmatpush2.bf16.msra.mxu0 0
  %625 = vmatprep.subr.bf16.mxu0 0
  %626 = vmatpush2.bf16.msra.mxu0 0
  %627 = vmatprep.subr.bf16.mxu0 0
  %628 = vmatpush2.bf16.msra.mxu0 0
  %629 = vmatprep.subr.bf16.mxu0 0
  %630 = vmatpush2.bf16.msra.mxu0 0
  %631 = vmatprep.mubr.bf16.mxu0 0
  %632 = vmatmul.mubr.bf16.gmra.mxu0 %v597
  %v633 = vpop.f32.mrf.mxu0
  %v634 = vadd.f32 0.0, %v633
  %v635 = vpop.f32.mrf.mxu0
  %v636 = vpop.f32.mrf.mxu0
  %v637 = vpop.f32.mrf.mxu0
  %638 = vdwg.mxu0
  %v639 = vadd.f32 %v250, %v634
  %v640 = vxor.u32 %v639, 2147483648
  %v641 = vmul.f32 %v640, 1.442695
  %v642 = vpow.pop %v641
  %v643 = vadd.f32 %v642, 1.0
  %v644 = vrcp.pop %v643
  %v645 = vmul.f32 1.0, %v644
  %v646 = vtanh.pop %v639
  %v647 = vsel %vm162, %v646, %v645
  %v648 = vmul.f32 %v647, %v580
  %650 = vrot.lane.b32.xlu0 %v647, 64
  %v651 = vpop.permute.xlu0 %650
  %v653 = vmul.f32 %v647, %v651
  %655 = vrot.lane.b32.xlu0 %v653, 32
  %v656 = vpop.permute.xlu0 %655
  %v658 = vadd.f32 %v648, %v656
  %v659 = vtanh.pop %v658
  %661 = vrot.lane.b32.xlu0 %v659, 64
  %v662 = vpop.permute.xlu0 %661
  %v664 = vmul.f32 %v647, %v662
  %666 = vrot.lane.b32.xlu0 %v664, 32
  %v667 = vpop.permute.xlu0 %666
  %669 = vst.msk [vmem:[#allocation2 + $0x20] sm:$0xff] %vm279, %v667
  %v670 = vpack.c.bf16 %v664, %v664
  %672 = vrot.lane.b32.xlu0 %v670, 32
  %v673 = vpop.permute.xlu0 %672
  %v675 = vsel %vm279, %v673, 0
  %677 = vmatprep.subr.bf16.mxu0 0
  %678 = vmatpush1.bf16.msra.mxu0 0
  %679 = vmatprep.subr.bf16.mxu0 0
  %680 = vmatpush1.bf16.msra.mxu0 0
  %681 = vmatprep.subr.bf16.mxu0 0
  %682 = vmatpush1.bf16.msra.mxu0 0
  %683 = vmatprep.subr.bf16.mxu0 0
  %684 = vmatpush1.bf16.msra.mxu0 0
  %685 = vmatprep.subr.bf16.mxu0 0
  %686 = vmatpush1.bf16.msra.mxu0 0
  %687 = vmatprep.subr.bf16.mxu0 0
  %688 = vmatpush1.bf16.msra.mxu0 0
  %689 = vmatprep.subr.bf16.mxu0 0
  %690 = vmatpush1.bf16.msra.mxu0 %v276
  %691 = vmatprep.subr.bf16.mxu0 0
  %692 = vmatpush1.bf16.msra.mxu0 %v275
  %693 = vmatprep.subr.bf16.mxu0 0
  %694 = vmatpush2.bf16.msra.mxu0 0
  %695 = vmatprep.subr.bf16.mxu0 0
  %696 = vmatpush2.bf16.msra.mxu0 0
  %697 = vmatprep.subr.bf16.mxu0 0
  %698 = vmatpush2.bf16.msra.mxu0 0
  %699 = vmatprep.subr.bf16.mxu0 0
  %700 = vmatpush2.bf16.msra.mxu0 0
  %701 = vmatprep.subr.bf16.mxu0 0
  %702 = vmatpush2.bf16.msra.mxu0 0
  %703 = vmatprep.subr.bf16.mxu0 0
  %704 = vmatpush2.bf16.msra.mxu0 0
  %705 = vmatprep.subr.bf16.mxu0 0
  %706 = vmatpush2.bf16.msra.mxu0 0
  %707 = vmatprep.subr.bf16.mxu0 0
  %708 = vmatpush2.bf16.msra.mxu0 0
  %709 = vmatprep.mubr.bf16.mxu0 0
  %710 = vmatmul.mubr.bf16.gmra.mxu0 %v675
  %v711 = vpop.f32.mrf.mxu0
  %v712 = vadd.f32 0.0, %v711
  %v713 = vpop.f32.mrf.mxu0
  %v714 = vpop.f32.mrf.mxu0
  %v715 = vpop.f32.mrf.mxu0
  %716 = vdwg.mxu0
  %v717 = vadd.f32 %v253, %v712
  %v718 = vxor.u32 %v717, 2147483648
  %v719 = vmul.f32 %v718, 1.442695
  %v720 = vpow.pop %v719
  %v721 = vadd.f32 %v720, 1.0
  %v722 = vrcp.pop %v721
  %v723 = vmul.f32 1.0, %v722
  %v724 = vtanh.pop %v717
  %v725 = vsel %vm162, %v724, %v723
  %v726 = vmul.f32 %v725, %v658
  %728 = vrot.lane.b32.xlu0 %v725, 64
  %v729 = vpop.permute.xlu0 %728
  %v731 = vmul.f32 %v725, %v729
  %733 = vrot.lane.b32.xlu0 %v731, 32
  %v734 = vpop.permute.xlu0 %733
  %v736 = vadd.f32 %v726, %v734
  %v737 = vtanh.pop %v736
  %739 = vrot.lane.b32.xlu0 %v737, 64
  %v740 = vpop.permute.xlu0 %739
  %v742 = vmul.f32 %v725, %v740
  %744 = vrot.lane.b32.xlu0 %v742, 32
  %v745 = vpop.permute.xlu0 %744
  %747 = vst.msk [vmem:[#allocation2 + $0x28] sm:$0xff] %vm279, %v745
  %v748 = vpack.c.bf16 %v742, %v742
  %750 = vrot.lane.b32.xlu0 %v748, 32
  %v751 = vpop.permute.xlu0 %750
  %v753 = vsel %vm279, %v751, 0
  %755 = vmatprep.subr.bf16.mxu0 0
  %756 = vmatpush1.bf16.msra.mxu0 0
  %757 = vmatprep.subr.bf16.mxu0 0
  %758 = vmatpush1.bf16.msra.mxu0 0
  %759 = vmatprep.subr.bf16.mxu0 0
  %760 = vmatpush1.bf16.msra.mxu0 0
  %761 = vmatprep.subr.bf16.mxu0 0
  %762 = vmatpush1.bf16.msra.mxu0 0
  %763 = vmatprep.subr.bf16.mxu0 0
  %764 = vmatpush1.bf16.msra.mxu0 0
  %765 = vmatprep.subr.bf16.mxu0 0
  %766 = vmatpush1.bf16.msra.mxu0 0
  %767 = vmatprep.subr.bf16.mxu0 0
  %768 = vmatpush1.bf16.msra.mxu0 %v276
  %769 = vmatprep.subr.bf16.mxu0 0
  %770 = vmatpush1.bf16.msra.mxu0 %v275
  %771 = vmatprep.subr.bf16.mxu0 0
  %772 = vmatpush2.bf16.msra.mxu0 0
  %773 = vmatprep.subr.bf16.mxu0 0
  %774 = vmatpush2.bf16.msra.mxu0 0
  %775 = vmatprep.subr.bf16.mxu0 0
  %776 = vmatpush2.bf16.msra.mxu0 0
  %777 = vmatprep.subr.bf16.mxu0 0
  %778 = vmatpush2.bf16.msra.mxu0 0
  %779 = vmatprep.subr.bf16.mxu0 0
  %780 = vmatpush2.bf16.msra.mxu0 0
  %781 = vmatprep.subr.bf16.mxu0 0
  %782 = vmatpush2.bf16.msra.mxu0 0
  %783 = vmatprep.subr.bf16.mxu0 0
  %784 = vmatpush2.bf16.msra.mxu0 0
  %785 = vmatprep.subr.bf16.mxu0 0
  %786 = vmatpush2.bf16.msra.mxu0 0
  %787 = vmatprep.mubr.bf16.mxu0 0
  %788 = vmatmul.mubr.bf16.gmra.mxu0 %v753
  %v789 = vpop.f32.mrf.mxu0
  %v790 = vadd.f32 0.0, %v789
  %v791 = vpop.f32.mrf.mxu0
  %v792 = vpop.f32.mrf.mxu0
  %v793 = vpop.f32.mrf.mxu0
  %794 = vdwg.mxu0
  %v795 = vadd.f32 %v258, %v790
  %v796 = vxor.u32 %v795, 2147483648
  %v797 = vmul.f32 %v796, 1.442695
  %v798 = vpow.pop %v797
  %v799 = vadd.f32 %v798, 1.0
  %v800 = vrcp.pop %v799
  %v801 = vmul.f32 1.0, %v800
  %v802 = vtanh.pop %v795
  %v803 = vsel %vm162, %v802, %v801
  %v804 = vmul.f32 %v803, %v736
  %806 = vrot.lane.b32.xlu0 %v803, 64
  %v807 = vpop.permute.xlu0 %806
  %v809 = vmul.f32 %v803, %v807
  %811 = vrot.lane.b32.xlu0 %v809, 32
  %v812 = vpop.permute.xlu0 %811
  %v814 = vadd.f32 %v804, %v812
  %v815 = vtanh.pop %v814
  %817 = vrot.lane.b32.xlu0 %v815, 64
  %v818 = vpop.permute.xlu0 %817
  %v820 = vmul.f32 %v803, %v818
  %822 = vrot.lane.b32.xlu0 %v820, 32
  %v823 = vpop.permute.xlu0 %822
  %825 = vst.msk [vmem:[#allocation2 + $0x30] sm:$0xff] %vm279, %v823
  %v826 = vpack.c.bf16 %v820, %v820
  %828 = vrot.lane.b32.xlu0 %v826, 32
  %v829 = vpop.permute.xlu0 %828
  %v831 = vsel %vm279, %v829, 0
  %833 = vmatprep.subr.bf16.mxu0 0
  %834 = vmatpush1.bf16.msra.mxu0 0
  %835 = vmatprep.subr.bf16.mxu0 0
  %836 = vmatpush1.bf16.msra.mxu0 0
  %837 = vmatprep.subr.bf16.mxu0 0
  %838 = vmatpush1.bf16.msra.mxu0 0
  %839 = vmatprep.subr.bf16.mxu0 0
  %840 = vmatpush1.bf16.msra.mxu0 0
  %841 = vmatprep.subr.bf16.mxu0 0
  %842 = vmatpush1.bf16.msra.mxu0 0
  %843 = vmatprep.subr.bf16.mxu0 0
  %844 = vmatpush1.bf16.msra.mxu0 0
  %845 = vmatprep.subr.bf16.mxu0 0
  %846 = vmatpush1.bf16.msra.mxu0 %v276
  %847 = vmatprep.subr.bf16.mxu0 0
  %848 = vmatpush1.bf16.msra.mxu0 %v275
  %849 = vmatprep.subr.bf16.mxu0 0
  %850 = vmatpush2.bf16.msra.mxu0 0
  %851 = vmatprep.subr.bf16.mxu0 0
  %852 = vmatpush2.bf16.msra.mxu0 0
  %853 = vmatprep.subr.bf16.mxu0 0
  %854 = vmatpush2.bf16.msra.mxu0 0
  %855 = vmatprep.subr.bf16.mxu0 0
  %856 = vmatpush2.bf16.msra.mxu0 0
  %857 = vmatprep.subr.bf16.mxu0 0
  %858 = vmatpush2.bf16.msra.mxu0 0
  %859 = vmatprep.subr.bf16.mxu0 0
  %860 = vmatpush2.bf16.msra.mxu0 0
  %861 = vmatprep.subr.bf16.mxu0 0
  %862 = vmatpush2.bf16.msra.mxu0 0
  %863 = vmatprep.subr.bf16.mxu0 0
  %864 = vmatpush2.bf16.msra.mxu0 0
  %865 = vmatprep.mubr.bf16.mxu0 0
  %866 = vmatmul.mubr.bf16.gmra.mxu0 %v831
  %v867 = vpop.f32.mrf.mxu0
  %v868 = vadd.f32 0.0, %v867
  %v869 = vpop.f32.mrf.mxu0
  %v870 = vpop.f32.mrf.mxu0
  %v871 = vpop.f32.mrf.mxu0
  %872 = vdwg.mxu0
  %v873 = vadd.f32 %v261, %v868
  %v874 = vxor.u32 %v873, 2147483648
  %v875 = vmul.f32 %v874, 1.442695
  %v876 = vpow.pop %v875
  %v877 = vadd.f32 %v876, 1.0
  %v878 = vrcp.pop %v877
  %v879 = vmul.f32 1.0, %v878
  %v880 = vtanh.pop %v873
  %v881 = vsel %vm162, %v880, %v879
  %v882 = vmul.f32 %v881, %v814
  %884 = vrot.lane.b32.xlu0 %v881, 64
  %v885 = vpop.permute.xlu0 %884
  %v887 = vmul.f32 %v881, %v885
  %889 = vrot.lane.b32.xlu0 %v887, 32
  %v890 = vpop.permute.xlu0 %889
  %v892 = vadd.f32 %v882, %v890
  %v893 = vtanh.pop %v892
  %895 = vrot.lane.b32.xlu0 %v893, 64
  %v896 = vpop.permute.xlu0 %895
  %v898 = vmul.f32 %v881, %v896
  %900 = vrot.lane.b32.xlu0 %v898, 32
  %v901 = vpop.permute.xlu0 %900
  %903 = vst.msk [vmem:[#allocation2 + $0x38] sm:$0xff] %vm279, %v901
  %904 = vst.msk [vmem:[%s14] sm:$0xff] %vm279, %v901
  %906 = vrot.lane.b32.xlu0 %v892, 96
  %v907 = vpop.permute.xlu0 %906
  %909 = vst.msk [vmem:[%s15] sm:$0xff] %vm279, %v907
  %v910 = vld [vmem:[#allocation2] sm:$0xff]
  %v911 = vld [vmem:[#allocation2 + $0x8] sm:$0xff]
  %v912 = vld [vmem:[#allocation2 + $0x10] sm:$0xff]
  %v913 = vld [vmem:[#allocation2 + $0x18] sm:$0xff]
  %v914 = vld [vmem:[#allocation2 + $0x20] sm:$0xff]
  %v915 = vld [vmem:[#allocation2 + $0x28] sm:$0xff]
  %v916 = vld [vmem:[#allocation2 + $0x30] sm:$0xff]
  %v917 = vld [vmem:[#allocation2 + $0x38] sm:$0xff]
  %v918 = vld [vmem:[%s9] sm:$0xf]
  %v919 = vld [vmem:[%s9 + $0x4] sm:$0xf]
  %v920 = vld [vmem:[%s9 + $0x8] sm:$0xf]
  %v921 = vld [vmem:[%s9 + $0xc] sm:$0xf]
  %v922 = vpack.c.bf16 %v911, %v910
  %v923 = vpack.c.bf16 %v913, %v912
  %v924 = vpack.c.bf16 %v915, %v914
  %v925 = vpack.c.bf16 %v917, %v916
  %v926 = vld [vmem:[%s8] sm:$0xf]
  %v927 = vld [vmem:[%s8 + $0x4] sm:$0xf]
  %v928 = vld [vmem:[%s8 + $0x8] sm:$0xf]
  %v929 = vld [vmem:[%s8 + $0xc] sm:$0xf]
  %v930 = vld [vmem:[%s10] sm:$0x1]
  %v932 = vlaneseq
  %v933 = vshrl.u32 %v932, 7
  %v934 = vsub.s32 0, %v933
  %v935 = vrot.slane %v930, %v934
  %v941 = vunpack.c.l.b16 %v926
  %v942 = vunpack.c.l.b16 %v927
  %v943 = vunpack.c.l.b16 %v928
  %v944 = vunpack.c.l.b16 %v929
  %v945 = vpack.c.b16 %v942, %v941
  %v946 = vpack.c.b16 %v944, %v943
  %v950 = vsel %vm279, %v922, 0
  %v953 = vsel %vm279, %v923, 0
  %v956 = vsel %vm279, %v924, 0
  %v959 = vsel %vm279, %v925, 0
  %961 = vmatprep.subr.bf16.mxu0 0
  %962 = vmatpush1.bf16.msra.mxu0 0
  %963 = vmatprep.subr.bf16.mxu0 0
  %964 = vmatpush1.bf16.msra.mxu0 0
  %965 = vmatprep.subr.bf16.mxu0 0
  %966 = vmatpush1.bf16.msra.mxu0 0
  %967 = vmatprep.subr.bf16.mxu0 0
  %968 = vmatpush1.bf16.msra.mxu0 0
  %969 = vmatprep.subr.bf16.mxu0 0
  %970 = vmatpush1.bf16.msra.mxu0 0
  %971 = vmatprep.subr.bf16.mxu0 0
  %972 = vmatpush1.bf16.msra.mxu0 0
  %973 = vmatprep.subr.bf16.mxu0 0
  %974 = vmatpush1.bf16.msra.mxu0 %v946
  %975 = vmatprep.subr.bf16.mxu0 0
  %976 = vmatpush1.bf16.msra.mxu0 %v945
  %977 = vmatprep.subr.bf16.mxu0 0
  %978 = vmatpush2.bf16.msra.mxu0 0
  %979 = vmatprep.subr.bf16.mxu0 0
  %980 = vmatpush2.bf16.msra.mxu0 0
  %981 = vmatprep.subr.bf16.mxu0 0
  %982 = vmatpush2.bf16.msra.mxu0 0
  %983 = vmatprep.subr.bf16.mxu0 0
  %984 = vmatpush2.bf16.msra.mxu0 0
  %985 = vmatprep.subr.bf16.mxu0 0
  %986 = vmatpush2.bf16.msra.mxu0 0
  %987 = vmatprep.subr.bf16.mxu0 0
  %988 = vmatpush2.bf16.msra.mxu0 0
  %989 = vmatprep.subr.bf16.mxu0 0
  %990 = vmatpush2.bf16.msra.mxu0 0
  %991 = vmatprep.subr.bf16.mxu0 0
  %992 = vmatpush2.bf16.msra.mxu0 0
  %993 = vmatprep.mubr.bf16.mxu0 0
  %994 = vmatmul.mubr.bf16.gmra.mxu0 %v950
  %v995 = vpop.f32.mrf.mxu0
  %v996 = vadd.f32 %v935, %v995
  %v997 = vpop.f32.mrf.mxu0
  %v998 = vpop.f32.mrf.mxu0
  %v999 = vadd.f32 %v935, %v998
  %v1000 = vpop.f32.mrf.mxu0
  %1001 = vmatprep.mubr.bf16.mxu0 0
  %1002 = vmatmul.mubr.bf16.gmra.mxu0 %v953
  %v1003 = vpop.f32.mrf.mxu0
  %v1004 = vadd.f32 %v935, %v1003
  %v1005 = vpop.f32.mrf.mxu0
  %v1006 = vpop.f32.mrf.mxu0
  %v1007 = vadd.f32 %v935, %v1006
  %v1008 = vpop.f32.mrf.mxu0
  %1009 = vmatprep.mubr.bf16.mxu0 0
  %1010 = vmatmul.mubr.bf16.gmra.mxu0 %v956
  %v1011 = vpop.f32.mrf.mxu0
  %v1012 = vadd.f32 %v935, %v1011
  %v1013 = vpop.f32.mrf.mxu0
  %v1014 = vpop.f32.mrf.mxu0
  %v1015 = vadd.f32 %v935, %v1014
  %v1016 = vpop.f32.mrf.mxu0
  %1017 = vmatprep.mubr.bf16.mxu0 0
  %1018 = vmatmul.mubr.bf16.gmra.mxu0 %v959
  %v1019 = vpop.f32.mrf.mxu0
  %v1020 = vadd.f32 %v935, %v1019
  %v1021 = vpop.f32.mrf.mxu0
  %v1022 = vpop.f32.mrf.mxu0
  %v1023 = vadd.f32 %v935, %v1022
  %v1024 = vpop.f32.mrf.mxu0
  %1025 = vdwg.mxu0
  %s1026 = scalar_lea.vmem %s1, 8
  %v1027 = vld [vmem:[%s1026] sm:$0xff]
  %s1028 = scalar_lea.vmem %s2, 8
  %v1029 = vld [vmem:[%s1028] sm:$0xff]
  %v1030 = vpack.c.bf16 %v1027, %v1027
  %v1035 = vunpack.c.l.b16 %v918
  %v1036 = vunpack.c.l.b16 %v919
  %v1037 = vunpack.c.l.b16 %v920
  %v1038 = vunpack.c.l.b16 %v921
  %v1039 = vpack.c.b16 %v1036, %v1035
  %v1040 = vpack.c.b16 %v1038, %v1037
  %v1044 = vsel %vm279, %v1030, 0
  %1046 = vmatprep.subr.bf16.mxu0 0
  %1047 = vmatpush1.bf16.msra.mxu0 0
  %1048 = vmatprep.subr.bf16.mxu0 0
  %1049 = vmatpush1.bf16.msra.mxu0 0
  %1050 = vmatprep.subr.bf16.mxu0 0
  %1051 = vmatpush1.bf16.msra.mxu0 0
  %1052 = vmatprep.subr.bf16.mxu0 0
  %1053 = vmatpush1.bf16.msra.mxu0 0
  %1054 = vmatprep.subr.bf16.mxu0 0
  %1055 = vmatpush1.bf16.msra.mxu0 0
  %1056 = vmatprep.subr.bf16.mxu0 0
  %1057 = vmatpush1.bf16.msra.mxu0 0
  %1058 = vmatprep.subr.bf16.mxu0 0
  %1059 = vmatpush1.bf16.msra.mxu0 %v1040
  %1060 = vmatprep.subr.bf16.mxu0 0
  %1061 = vmatpush1.bf16.msra.mxu0 %v1039
  %1062 = vmatprep.subr.bf16.mxu0 0
  %1063 = vmatpush2.bf16.msra.mxu0 0
  %1064 = vmatprep.subr.bf16.mxu0 0
  %1065 = vmatpush2.bf16.msra.mxu0 0
  %1066 = vmatprep.subr.bf16.mxu0 0
  %1067 = vmatpush2.bf16.msra.mxu0 0
  %1068 = vmatprep.subr.bf16.mxu0 0
  %1069 = vmatpush2.bf16.msra.mxu0 0
  %1070 = vmatprep.subr.bf16.mxu0 0
  %1071 = vmatpush2.bf16.msra.mxu0 0
  %1072 = vmatprep.subr.bf16.mxu0 0
  %1073 = vmatpush2.bf16.msra.mxu0 0
  %1074 = vmatprep.subr.bf16.mxu0 0
  %1075 = vmatpush2.bf16.msra.mxu0 0
  %1076 = vmatprep.subr.bf16.mxu0 0
  %1077 = vmatpush2.bf16.msra.mxu0 0
  %1078 = vmatprep.mubr.bf16.mxu0 0
  %1079 = vmatmul.mubr.bf16.gmra.mxu0 %v1044
  %v1080 = vpop.f32.mrf.mxu0
  %v1081 = vadd.f32 0.0, %v1080
  %v1082 = vpop.f32.mrf.mxu0
  %v1083 = vpop.f32.mrf.mxu0
  %v1084 = vpop.f32.mrf.mxu0
  %1085 = vdwg.mxu0
  %v1086 = vadd.f32 %v996, %v1081
  %v1087 = vxor.u32 %v1086, 2147483648
  %v1088 = vmul.f32 %v1087, 1.442695
  %v1089 = vpow.pop %v1088
  %v1090 = vadd.f32 %v1089, 1.0
  %v1091 = vrcp.pop %v1090
  %v1092 = vmul.f32 1.0, %v1091
  %v1093 = vtanh.pop %v1086
  %v1094 = vsel %vm162, %v1093, %v1092
  %1096 = vrot.lane.b32.xlu0 %v1029, 32
  %v1097 = vpop.permute.xlu0 %1096
  %v1099 = vmul.f32 %v1094, %v1097
  %1101 = vrot.lane.b32.xlu0 %v1094, 64
  %v1102 = vpop.permute.xlu0 %1101
  %v1104 = vmul.f32 %v1094, %v1102
  %1106 = vrot.lane.b32.xlu0 %v1104, 32
  %v1107 = vpop.permute.xlu0 %1106
  %v1109 = vadd.f32 %v1099, %v1107
  %v1110 = vtanh.pop %v1109
  %1112 = vrot.lane.b32.xlu0 %v1110, 64
  %v1113 = vpop.permute.xlu0 %1112
  %v1115 = vmul.f32 %v1094, %v1113
  %v1116 = vpack.c.bf16 %v1115, %v1115
  %1118 = vrot.lane.b32.xlu0 %v1116, 32
  %v1119 = vpop.permute.xlu0 %1118
  %v1121 = vsel %vm279, %v1119, 0
  %1123 = vmatprep.subr.bf16.mxu0 0
  %1124 = vmatpush1.bf16.msra.mxu0 0
  %1125 = vmatprep.subr.bf16.mxu0 0
  %1126 = vmatpush1.bf16.msra.mxu0 0
  %1127 = vmatprep.subr.bf16.mxu0 0
  %1128 = vmatpush1.bf16.msra.mxu0 0
  %1129 = vmatprep.subr.bf16.mxu0 0
  %1130 = vmatpush1.bf16.msra.mxu0 0
  %1131 = vmatprep.subr.bf16.mxu0 0
  %1132 = vmatpush1.bf16.msra.mxu0 0
  %1133 = vmatprep.subr.bf16.mxu0 0
  %1134 = vmatpush1.bf16.msra.mxu0 0
  %1135 = vmatprep.subr.bf16.mxu0 0
  %1136 = vmatpush1.bf16.msra.mxu0 %v1040
  %1137 = vmatprep.subr.bf16.mxu0 0
  %1138 = vmatpush1.bf16.msra.mxu0 %v1039
  %1139 = vmatprep.subr.bf16.mxu0 0
  %1140 = vmatpush2.bf16.msra.mxu0 0
  %1141 = vmatprep.subr.bf16.mxu0 0
  %1142 = vmatpush2.bf16.msra.mxu0 0
  %1143 = vmatprep.subr.bf16.mxu0 0
  %1144 = vmatpush2.bf16.msra.mxu0 0
  %1145 = vmatprep.subr.bf16.mxu0 0
  %1146 = vmatpush2.bf16.msra.mxu0 0
  %1147 = vmatprep.subr.bf16.mxu0 0
  %1148 = vmatpush2.bf16.msra.mxu0 0
  %1149 = vmatprep.subr.bf16.mxu0 0
  %1150 = vmatpush2.bf16.msra.mxu0 0
  %1151 = vmatprep.subr.bf16.mxu0 0
  %1152 = vmatpush2.bf16.msra.mxu0 0
  %1153 = vmatprep.subr.bf16.mxu0 0
  %1154 = vmatpush2.bf16.msra.mxu0 0
  %1155 = vmatprep.mubr.bf16.mxu0 0
  %1156 = vmatmul.mubr.bf16.gmra.mxu0 %v1121
  %v1157 = vpop.f32.mrf.mxu0
  %v1158 = vadd.f32 0.0, %v1157
  %v1159 = vpop.f32.mrf.mxu0
  %v1160 = vpop.f32.mrf.mxu0
  %v1161 = vpop.f32.mrf.mxu0
  %1162 = vdwg.mxu0
  %v1163 = vadd.f32 %v999, %v1158
  %v1164 = vxor.u32 %v1163, 2147483648
  %v1165 = vmul.f32 %v1164, 1.442695
  %v1166 = vpow.pop %v1165
  %v1167 = vadd.f32 %v1166, 1.0
  %v1168 = vrcp.pop %v1167
  %v1169 = vmul.f32 1.0, %v1168
  %v1170 = vtanh.pop %v1163
  %v1171 = vsel %vm162, %v1170, %v1169
  %v1172 = vmul.f32 %v1171, %v1109
  %1174 = vrot.lane.b32.xlu0 %v1171, 64
  %v1175 = vpop.permute.xlu0 %1174
  %v1177 = vmul.f32 %v1171, %v1175
  %1179 = vrot.lane.b32.xlu0 %v1177, 32
  %v1180 = vpop.permute.xlu0 %1179
  %v1182 = vadd.f32 %v1172, %v1180
  %v1183 = vtanh.pop %v1182
  %1185 = vrot.lane.b32.xlu0 %v1183, 64
  %v1186 = vpop.permute.xlu0 %1185
  %v1188 = vmul.f32 %v1171, %v1186
  %v1189 = vpack.c.bf16 %v1188, %v1188
  %1191 = vrot.lane.b32.xlu0 %v1189, 32
  %v1192 = vpop.permute.xlu0 %1191
  %v1194 = vsel %vm279, %v1192, 0
  %1196 = vmatprep.subr.bf16.mxu0 0
  %1197 = vmatpush1.bf16.msra.mxu0 0
  %1198 = vmatprep.subr.bf16.mxu0 0
  %1199 = vmatpush1.bf16.msra.mxu0 0
  %1200 = vmatprep.subr.bf16.mxu0 0
  %1201 = vmatpush1.bf16.msra.mxu0 0
  %1202 = vmatprep.subr.bf16.mxu0 0
  %1203 = vmatpush1.bf16.msra.mxu0 0
  %1204 = vmatprep.subr.bf16.mxu0 0
  %1205 = vmatpush1.bf16.msra.mxu0 0
  %1206 = vmatprep.subr.bf16.mxu0 0
  %1207 = vmatpush1.bf16.msra.mxu0 0
  %1208 = vmatprep.subr.bf16.mxu0 0
  %1209 = vmatpush1.bf16.msra.mxu0 %v1040
  %1210 = vmatprep.subr.bf16.mxu0 0
  %1211 = vmatpush1.bf16.msra.mxu0 %v1039
  %1212 = vmatprep.subr.bf16.mxu0 0
  %1213 = vmatpush2.bf16.msra.mxu0 0
  %1214 = vmatprep.subr.bf16.mxu0 0
  %1215 = vmatpush2.bf16.msra.mxu0 0
  %1216 = vmatprep.subr.bf16.mxu0 0
  %1217 = vmatpush2.bf16.msra.mxu0 0
  %1218 = vmatprep.subr.bf16.mxu0 0
  %1219 = vmatpush2.bf16.msra.mxu0 0
  %1220 = vmatprep.subr.bf16.mxu0 0
  %1221 = vmatpush2.bf16.msra.mxu0 0
  %1222 = vmatprep.subr.bf16.mxu0 0
  %1223 = vmatpush2.bf16.msra.mxu0 0
  %1224 = vmatprep.subr.bf16.mxu0 0
  %1225 = vmatpush2.bf16.msra.mxu0 0
  %1226 = vmatprep.subr.bf16.mxu0 0
  %1227 = vmatpush2.bf16.msra.mxu0 0
  %1228 = vmatprep.mubr.bf16.mxu0 0
  %1229 = vmatmul.mubr.bf16.gmra.mxu0 %v1194
  %v1230 = vpop.f32.mrf.mxu0
  %v1231 = vadd.f32 0.0, %v1230
  %v1232 = vpop.f32.mrf.mxu0
  %v1233 = vpop.f32.mrf.mxu0
  %v1234 = vpop.f32.mrf.mxu0
  %1235 = vdwg.mxu0
  %v1236 = vadd.f32 %v1004, %v1231
  %v1237 = vxor.u32 %v1236, 2147483648
  %v1238 = vmul.f32 %v1237, 1.442695
  %v1239 = vpow.pop %v1238
  %v1240 = vadd.f32 %v1239, 1.0
  %v1241 = vrcp.pop %v1240
  %v1242 = vmul.f32 1.0, %v1241
  %v1243 = vtanh.pop %v1236
  %v1244 = vsel %vm162, %v1243, %v1242
  %v1245 = vmul.f32 %v1244, %v1182
  %1247 = vrot.lane.b32.xlu0 %v1244, 64
  %v1248 = vpop.permute.xlu0 %1247
  %v1250 = vmul.f32 %v1244, %v1248
  %1252 = vrot.lane.b32.xlu0 %v1250, 32
  %v1253 = vpop.permute.xlu0 %1252
  %v1255 = vadd.f32 %v1245, %v1253
  %v1256 = vtanh.pop %v1255
  %1258 = vrot.lane.b32.xlu0 %v1256, 64
  %v1259 = vpop.permute.xlu0 %1258
  %v1261 = vmul.f32 %v1244, %v1259
  %v1262 = vpack.c.bf16 %v1261, %v1261
  %1264 = vrot.lane.b32.xlu0 %v1262, 32
  %v1265 = vpop.permute.xlu0 %1264
  %v1267 = vsel %vm279, %v1265, 0
  %1269 = vmatprep.subr.bf16.mxu0 0
  %1270 = vmatpush1.bf16.msra.mxu0 0
  %1271 = vmatprep.subr.bf16.mxu0 0
  %1272 = vmatpush1.bf16.msra.mxu0 0
  %1273 = vmatprep.subr.bf16.mxu0 0
  %1274 = vmatpush1.bf16.msra.mxu0 0
  %1275 = vmatprep.subr.bf16.mxu0 0
  %1276 = vmatpush1.bf16.msra.mxu0 0
  %1277 = vmatprep.subr.bf16.mxu0 0
  %1278 = vmatpush1.bf16.msra.mxu0 0
  %1279 = vmatprep.subr.bf16.mxu0 0
  %1280 = vmatpush1.bf16.msra.mxu0 0
  %1281 = vmatprep.subr.bf16.mxu0 0
  %1282 = vmatpush1.bf16.msra.mxu0 %v1040
  %1283 = vmatprep.subr.bf16.mxu0 0
  %1284 = vmatpush1.bf16.msra.mxu0 %v1039
  %1285 = vmatprep.subr.bf16.mxu0 0
  %1286 = vmatpush2.bf16.msra.mxu0 0
  %1287 = vmatprep.subr.bf16.mxu0 0
  %1288 = vmatpush2.bf16.msra.mxu0 0
  %1289 = vmatprep.subr.bf16.mxu0 0
  %1290 = vmatpush2.bf16.msra.mxu0 0
  %1291 = vmatprep.subr.bf16.mxu0 0
  %1292 = vmatpush2.bf16.msra.mxu0 0
  %1293 = vmatprep.subr.bf16.mxu0 0
  %1294 = vmatpush2.bf16.msra.mxu0 0
  %1295 = vmatprep.subr.bf16.mxu0 0
  %1296 = vmatpush2.bf16.msra.mxu0 0
  %1297 = vmatprep.subr.bf16.mxu0 0
  %1298 = vmatpush2.bf16.msra.mxu0 0
  %1299 = vmatprep.subr.bf16.mxu0 0
  %1300 = vmatpush2.bf16.msra.mxu0 0
  %1301 = vmatprep.mubr.bf16.mxu0 0
  %1302 = vmatmul.mubr.bf16.gmra.mxu0 %v1267
  %v1303 = vpop.f32.mrf.mxu0
  %v1304 = vadd.f32 0.0, %v1303
  %v1305 = vpop.f32.mrf.mxu0
  %v1306 = vpop.f32.mrf.mxu0
  %v1307 = vpop.f32.mrf.mxu0
  %1308 = vdwg.mxu0
  %v1309 = vadd.f32 %v1007, %v1304
  %v1310 = vxor.u32 %v1309, 2147483648
  %v1311 = vmul.f32 %v1310, 1.442695
  %v1312 = vpow.pop %v1311
  %v1313 = vadd.f32 %v1312, 1.0
  %v1314 = vrcp.pop %v1313
  %v1315 = vmul.f32 1.0, %v1314
  %v1316 = vtanh.pop %v1309
  %v1317 = vsel %vm162, %v1316, %v1315
  %v1318 = vmul.f32 %v1317, %v1255
  %1320 = vrot.lane.b32.xlu0 %v1317, 64
  %v1321 = vpop.permute.xlu0 %1320
  %v1323 = vmul.f32 %v1317, %v1321
  %1325 = vrot.lane.b32.xlu0 %v1323, 32
  %v1326 = vpop.permute.xlu0 %1325
  %v1328 = vadd.f32 %v1318, %v1326
  %v1329 = vtanh.pop %v1328
  %1331 = vrot.lane.b32.xlu0 %v1329, 64
  %v1332 = vpop.permute.xlu0 %1331
  %v1334 = vmul.f32 %v1317, %v1332
  %v1335 = vpack.c.bf16 %v1334, %v1334
  %1337 = vrot.lane.b32.xlu0 %v1335, 32
  %v1338 = vpop.permute.xlu0 %1337
  %v1340 = vsel %vm279, %v1338, 0
  %1342 = vmatprep.subr.bf16.mxu0 0
  %1343 = vmatpush1.bf16.msra.mxu0 0
  %1344 = vmatprep.subr.bf16.mxu0 0
  %1345 = vmatpush1.bf16.msra.mxu0 0
  %1346 = vmatprep.subr.bf16.mxu0 0
  %1347 = vmatpush1.bf16.msra.mxu0 0
  %1348 = vmatprep.subr.bf16.mxu0 0
  %1349 = vmatpush1.bf16.msra.mxu0 0
  %1350 = vmatprep.subr.bf16.mxu0 0
  %1351 = vmatpush1.bf16.msra.mxu0 0
  %1352 = vmatprep.subr.bf16.mxu0 0
  %1353 = vmatpush1.bf16.msra.mxu0 0
  %1354 = vmatprep.subr.bf16.mxu0 0
  %1355 = vmatpush1.bf16.msra.mxu0 %v1040
  %1356 = vmatprep.subr.bf16.mxu0 0
  %1357 = vmatpush1.bf16.msra.mxu0 %v1039
  %1358 = vmatprep.subr.bf16.mxu0 0
  %1359 = vmatpush2.bf16.msra.mxu0 0
  %1360 = vmatprep.subr.bf16.mxu0 0
  %1361 = vmatpush2.bf16.msra.mxu0 0
  %1362 = vmatprep.subr.bf16.mxu0 0
  %1363 = vmatpush2.bf16.msra.mxu0 0
  %1364 = vmatprep.subr.bf16.mxu0 0
  %1365 = vmatpush2.bf16.msra.mxu0 0
  %1366 = vmatprep.subr.bf16.mxu0 0
  %1367 = vmatpush2.bf16.msra.mxu0 0
  %1368 = vmatprep.subr.bf16.mxu0 0
  %1369 = vmatpush2.bf16.msra.mxu0 0
  %1370 = vmatprep.subr.bf16.mxu0 0
  %1371 = vmatpush2.bf16.msra.mxu0 0
  %1372 = vmatprep.subr.bf16.mxu0 0
  %1373 = vmatpush2.bf16.msra.mxu0 0
  %1374 = vmatprep.mubr.bf16.mxu0 0
  %1375 = vmatmul.mubr.bf16.gmra.mxu0 %v1340
  %v1376 = vpop.f32.mrf.mxu0
  %v1377 = vadd.f32 0.0, %v1376
  %v1378 = vpop.f32.mrf.mxu0
  %v1379 = vpop.f32.mrf.mxu0
  %v1380 = vpop.f32.mrf.mxu0
  %1381 = vdwg.mxu0
  %v1382 = vadd.f32 %v1012, %v1377
  %v1383 = vxor.u32 %v1382, 2147483648
  %v1384 = vmul.f32 %v1383, 1.442695
  %v1385 = vpow.pop %v1384
  %v1386 = vadd.f32 %v1385, 1.0
  %v1387 = vrcp.pop %v1386
  %v1388 = vmul.f32 1.0, %v1387
  %v1389 = vtanh.pop %v1382
  %v1390 = vsel %vm162, %v1389, %v1388
  %v1391 = vmul.f32 %v1390, %v1328
  %1393 = vrot.lane.b32.xlu0 %v1390, 64
  %v1394 = vpop.permute.xlu0 %1393
  %v1396 = vmul.f32 %v1390, %v1394
  %1398 = vrot.lane.b32.xlu0 %v1396, 32
  %v1399 = vpop.permute.xlu0 %1398
  %v1401 = vadd.f32 %v1391, %v1399
  %v1402 = vtanh.pop %v1401
  %1404 = vrot.lane.b32.xlu0 %v1402, 64
  %v1405 = vpop.permute.xlu0 %1404
  %v1407 = vmul.f32 %v1390, %v1405
  %v1408 = vpack.c.bf16 %v1407, %v1407
  %1410 = vrot.lane.b32.xlu0 %v1408, 32
  %v1411 = vpop.permute.xlu0 %1410
  %v1413 = vsel %vm279, %v1411, 0
  %1415 = vmatprep.subr.bf16.mxu0 0
  %1416 = vmatpush1.bf16.msra.mxu0 0
  %1417 = vmatprep.subr.bf16.mxu0 0
  %1418 = vmatpush1.bf16.msra.mxu0 0
  %1419 = vmatprep.subr.bf16.mxu0 0
  %1420 = vmatpush1.bf16.msra.mxu0 0
  %1421 = vmatprep.subr.bf16.mxu0 0
  %1422 = vmatpush1.bf16.msra.mxu0 0
  %1423 = vmatprep.subr.bf16.mxu0 0
  %1424 = vmatpush1.bf16.msra.mxu0 0
  %1425 = vmatprep.subr.bf16.mxu0 0
  %1426 = vmatpush1.bf16.msra.mxu0 0
  %1427 = vmatprep.subr.bf16.mxu0 0
  %1428 = vmatpush1.bf16.msra.mxu0 %v1040
  %1429 = vmatprep.subr.bf16.mxu0 0
  %1430 = vmatpush1.bf16.msra.mxu0 %v1039
  %1431 = vmatprep.subr.bf16.mxu0 0
  %1432 = vmatpush2.bf16.msra.mxu0 0
  %1433 = vmatprep.subr.bf16.mxu0 0
  %1434 = vmatpush2.bf16.msra.mxu0 0
  %1435 = vmatprep.subr.bf16.mxu0 0
  %1436 = vmatpush2.bf16.msra.mxu0 0
  %1437 = vmatprep.subr.bf16.mxu0 0
  %1438 = vmatpush2.bf16.msra.mxu0 0
  %1439 = vmatprep.subr.bf16.mxu0 0
  %1440 = vmatpush2.bf16.msra.mxu0 0
  %1441 = vmatprep.subr.bf16.mxu0 0
  %1442 = vmatpush2.bf16.msra.mxu0 0
  %1443 = vmatprep.subr.bf16.mxu0 0
  %1444 = vmatpush2.bf16.msra.mxu0 0
  %1445 = vmatprep.subr.bf16.mxu0 0
  %1446 = vmatpush2.bf16.msra.mxu0 0
  %1447 = vmatprep.mubr.bf16.mxu0 0
  %1448 = vmatmul.mubr.bf16.gmra.mxu0 %v1413
  %v1449 = vpop.f32.mrf.mxu0
  %v1450 = vadd.f32 0.0, %v1449
  %v1451 = vpop.f32.mrf.mxu0
  %v1452 = vpop.f32.mrf.mxu0
  %v1453 = vpop.f32.mrf.mxu0
  %1454 = vdwg.mxu0
  %v1455 = vadd.f32 %v1015, %v1450
  %v1456 = vxor.u32 %v1455, 2147483648
  %v1457 = vmul.f32 %v1456, 1.442695
  %v1458 = vpow.pop %v1457
  %v1459 = vadd.f32 %v1458, 1.0
  %v1460 = vrcp.pop %v1459
  %v1461 = vmul.f32 1.0, %v1460
  %v1462 = vtanh.pop %v1455
  %v1463 = vsel %vm162, %v1462, %v1461
  %v1464 = vmul.f32 %v1463, %v1401
  %1466 = vrot.lane.b32.xlu0 %v1463, 64
  %v1467 = vpop.permute.xlu0 %1466
  %v1469 = vmul.f32 %v1463, %v1467
  %1471 = vrot.lane.b32.xlu0 %v1469, 32
  %v1472 = vpop.permute.xlu0 %1471
  %v1474 = vadd.f32 %v1464, %v1472
  %v1475 = vtanh.pop %v1474
  %1477 = vrot.lane.b32.xlu0 %v1475, 64
  %v1478 = vpop.permute.xlu0 %1477
  %v1480 = vmul.f32 %v1463, %v1478
  %v1481 = vpack.c.bf16 %v1480, %v1480
  %1483 = vrot.lane.b32.xlu0 %v1481, 32
  %v1484 = vpop.permute.xlu0 %1483
  %v1486 = vsel %vm279, %v1484, 0
  %1488 = vmatprep.subr.bf16.mxu0 0
  %1489 = vmatpush1.bf16.msra.mxu0 0
  %1490 = vmatprep.subr.bf16.mxu0 0
  %1491 = vmatpush1.bf16.msra.mxu0 0
  %1492 = vmatprep.subr.bf16.mxu0 0
  %1493 = vmatpush1.bf16.msra.mxu0 0
  %1494 = vmatprep.subr.bf16.mxu0 0
  %1495 = vmatpush1.bf16.msra.mxu0 0
  %1496 = vmatprep.subr.bf16.mxu0 0
  %1497 = vmatpush1.bf16.msra.mxu0 0
  %1498 = vmatprep.subr.bf16.mxu0 0
  %1499 = vmatpush1.bf16.msra.mxu0 0
  %1500 = vmatprep.subr.bf16.mxu0 0
  %1501 = vmatpush1.bf16.msra.mxu0 %v1040
  %1502 = vmatprep.subr.bf16.mxu0 0
  %1503 = vmatpush1.bf16.msra.mxu0 %v1039
  %1504 = vmatprep.subr.bf16.mxu0 0
  %1505 = vmatpush2.bf16.msra.mxu0 0
  %1506 = vmatprep.subr.bf16.mxu0 0
  %1507 = vmatpush2.bf16.msra.mxu0 0
  %1508 = vmatprep.subr.bf16.mxu0 0
  %1509 = vmatpush2.bf16.msra.mxu0 0
  %1510 = vmatprep.subr.bf16.mxu0 0
  %1511 = vmatpush2.bf16.msra.mxu0 0
  %1512 = vmatprep.subr.bf16.mxu0 0
  %1513 = vmatpush2.bf16.msra.mxu0 0
  %1514 = vmatprep.subr.bf16.mxu0 0
  %1515 = vmatpush2.bf16.msra.mxu0 0
  %1516 = vmatprep.subr.bf16.mxu0 0
  %1517 = vmatpush2.bf16.msra.mxu0 0
  %1518 = vmatprep.subr.bf16.mxu0 0
  %1519 = vmatpush2.bf16.msra.mxu0 0
  %1520 = vmatprep.mubr.bf16.mxu0 0
  %1521 = vmatmul.mubr.bf16.gmra.mxu0 %v1486
  %v1522 = vpop.f32.mrf.mxu0
  %v1523 = vadd.f32 0.0, %v1522
  %v1524 = vpop.f32.mrf.mxu0
  %v1525 = vpop.f32.mrf.mxu0
  %v1526 = vpop.f32.mrf.mxu0
  %1527 = vdwg.mxu0
  %v1528 = vadd.f32 %v1020, %v1523
  %v1529 = vxor.u32 %v1528, 2147483648
  %v1530 = vmul.f32 %v1529, 1.442695
  %v1531 = vpow.pop %v1530
  %v1532 = vadd.f32 %v1531, 1.0
  %v1533 = vrcp.pop %v1532
  %v1534 = vmul.f32 1.0, %v1533
  %v1535 = vtanh.pop %v1528
  %v1536 = vsel %vm162, %v1535, %v1534
  %v1537 = vmul.f32 %v1536, %v1474
  %1539 = vrot.lane.b32.xlu0 %v1536, 64
  %v1540 = vpop.permute.xlu0 %1539
  %v1542 = vmul.f32 %v1536, %v1540
  %1544 = vrot.lane.b32.xlu0 %v1542, 32
  %v1545 = vpop.permute.xlu0 %1544
  %v1547 = vadd.f32 %v1537, %v1545
  %v1548 = vtanh.pop %v1547
  %1550 = vrot.lane.b32.xlu0 %v1548, 64
  %v1551 = vpop.permute.xlu0 %1550
  %v1553 = vmul.f32 %v1536, %v1551
  %v1554 = vpack.c.bf16 %v1553, %v1553
  %1556 = vrot.lane.b32.xlu0 %v1554, 32
  %v1557 = vpop.permute.xlu0 %1556
  %v1559 = vsel %vm279, %v1557, 0
  %1561 = vmatprep.subr.bf16.mxu0 0
  %1562 = vmatpush1.bf16.msra.mxu0 0
  %1563 = vmatprep.subr.bf16.mxu0 0
  %1564 = vmatpush1.bf16.msra.mxu0 0
  %1565 = vmatprep.subr.bf16.mxu0 0
  %1566 = vmatpush1.bf16.msra.mxu0 0
  %1567 = vmatprep.subr.bf16.mxu0 0
  %1568 = vmatpush1.bf16.msra.mxu0 0
  %1569 = vmatprep.subr.bf16.mxu0 0
  %1570 = vmatpush1.bf16.msra.mxu0 0
  %1571 = vmatprep.subr.bf16.mxu0 0
  %1572 = vmatpush1.bf16.msra.mxu0 0
  %1573 = vmatprep.subr.bf16.mxu0 0
  %1574 = vmatpush1.bf16.msra.mxu0 %v1040
  %1575 = vmatprep.subr.bf16.mxu0 0
  %1576 = vmatpush1.bf16.msra.mxu0 %v1039
  %1577 = vmatprep.subr.bf16.mxu0 0
  %1578 = vmatpush2.bf16.msra.mxu0 0
  %1579 = vmatprep.subr.bf16.mxu0 0
  %1580 = vmatpush2.bf16.msra.mxu0 0
  %1581 = vmatprep.subr.bf16.mxu0 0
  %1582 = vmatpush2.bf16.msra.mxu0 0
  %1583 = vmatprep.subr.bf16.mxu0 0
  %1584 = vmatpush2.bf16.msra.mxu0 0
  %1585 = vmatprep.subr.bf16.mxu0 0
  %1586 = vmatpush2.bf16.msra.mxu0 0
  %1587 = vmatprep.subr.bf16.mxu0 0
  %1588 = vmatpush2.bf16.msra.mxu0 0
  %1589 = vmatprep.subr.bf16.mxu0 0
  %1590 = vmatpush2.bf16.msra.mxu0 0
  %1591 = vmatprep.subr.bf16.mxu0 0
  %1592 = vmatpush2.bf16.msra.mxu0 0
  %1593 = vmatprep.mubr.bf16.mxu0 0
  %1594 = vmatmul.mubr.bf16.gmra.mxu0 %v1559
  %v1595 = vpop.f32.mrf.mxu0
  %v1596 = vadd.f32 0.0, %v1595
  %v1597 = vpop.f32.mrf.mxu0
  %v1598 = vpop.f32.mrf.mxu0
  %v1599 = vpop.f32.mrf.mxu0
  %1600 = vdwg.mxu0
  %v1601 = vadd.f32 %v1023, %v1596
  %v1602 = vxor.u32 %v1601, 2147483648
  %v1603 = vmul.f32 %v1602, 1.442695
  %v1604 = vpow.pop %v1603
  %v1605 = vadd.f32 %v1604, 1.0
  %v1606 = vrcp.pop %v1605
  %v1607 = vmul.f32 1.0, %v1606
  %v1608 = vtanh.pop %v1601
  %v1609 = vsel %vm162, %v1608, %v1607
  %v1610 = vmul.f32 %v1609, %v1547
  %1612 = vrot.lane.b32.xlu0 %v1609, 64
  %v1613 = vpop.permute.xlu0 %1612
  %v1615 = vmul.f32 %v1609, %v1613
  %1617 = vrot.lane.b32.xlu0 %v1615, 32
  %v1618 = vpop.permute.xlu0 %1617
  %v1620 = vadd.f32 %v1610, %v1618
  %v1621 = vtanh.pop %v1620
  %1623 = vrot.lane.b32.xlu0 %v1621, 64
  %v1624 = vpop.permute.xlu0 %1623
  %v1626 = vmul.f32 %v1609, %v1624
  %1628 = vrot.lane.b32.xlu0 %v1626, 32
  %v1629 = vpop.permute.xlu0 %1628
  %s1631 = scalar_lea.vmem %s14, 8
  %1632 = vst.msk [vmem:[%s1631] sm:$0xff] %vm279, %v1629
  %1634 = vrot.lane.b32.xlu0 %v1620, 96
  %v1635 = vpop.permute.xlu0 %1634
  %s1637 = scalar_lea.vmem %s15, 8
  %1638 = vst.msk [vmem:[%s1637] sm:$0xff] %vm279, %v1635
  %v1639 = vpack.c.bf16 %v1626, %v1626
  %v1640 = vld [vmem:[%s11] sm:$0xf]
  %v1641 = vld [vmem:[%s11 + $0x4] sm:$0xf]
  %v1642 = vld [vmem:[%s11 + $0x8] sm:$0xf]
  %v1643 = vld [vmem:[%s11 + $0xc] sm:$0xf]
  %v1644 = vld [vmem:[%s12] sm:$0x1]
  %v1646 = vlaneseq
  %v1647 = vshrl.u32 %v1646, 7
  %v1648 = vsub.s32 0, %v1647
  %v1649 = vrot.slane %v1644, %v1648
  %1652 = vrot.lane.b32.xlu0 %v1639, 32
  %v1653 = vpop.permute.xlu0 %1652
  %v1658 = vunpack.c.l.b16 %v1640
  %v1659 = vunpack.c.l.b16 %v1641
  %v1660 = vunpack.c.l.b16 %v1642
  %v1661 = vunpack.c.l.b16 %v1643
  %v1662 = vpack.c.b16 %v1659, %v1658
  %v1663 = vpack.c.b16 %v1661, %v1660
  %v1667 = vsel %vm279, %v1653, 0
  %1669 = vmatprep.subr.bf16.mxu0 0
  %1670 = vmatpush1.bf16.msra.mxu0 0
  %1671 = vmatprep.subr.bf16.mxu0 0
  %1672 = vmatpush1.bf16.msra.mxu0 0
  %1673 = vmatprep.subr.bf16.mxu0 0
  %1674 = vmatpush1.bf16.msra.mxu0 0
  %1675 = vmatprep.subr.bf16.mxu0 0
  %1676 = vmatpush1.bf16.msra.mxu0 0
  %1677 = vmatprep.subr.bf16.mxu0 0
  %1678 = vmatpush1.bf16.msra.mxu0 0
  %1679 = vmatprep.subr.bf16.mxu0 0
  %1680 = vmatpush1.bf16.msra.mxu0 0
  %1681 = vmatprep.subr.bf16.mxu0 0
  %1682 = vmatpush1.bf16.msra.mxu0 %v1663
  %1683 = vmatprep.subr.bf16.mxu0 0
  %1684 = vmatpush1.bf16.msra.mxu0 %v1662
  %1685 = vmatprep.subr.bf16.mxu0 0
  %1686 = vmatpush2.bf16.msra.mxu0 0
  %1687 = vmatprep.subr.bf16.mxu0 0
  %1688 = vmatpush2.bf16.msra.mxu0 0
  %1689 = vmatprep.subr.bf16.mxu0 0
  %1690 = vmatpush2.bf16.msra.mxu0 0
  %1691 = vmatprep.subr.bf16.mxu0 0
  %1692 = vmatpush2.bf16.msra.mxu0 0
  %1693 = vmatprep.subr.bf16.mxu0 0
  %1694 = vmatpush2.bf16.msra.mxu0 0
  %1695 = vmatprep.subr.bf16.mxu0 0
  %1696 = vmatpush2.bf16.msra.mxu0 0
  %1697 = vmatprep.subr.bf16.mxu0 0
  %1698 = vmatpush2.bf16.msra.mxu0 0
  %1699 = vmatprep.subr.bf16.mxu0 0
  %1700 = vmatpush2.bf16.msra.mxu0 0
  %1701 = vmatprep.mubr.bf16.mxu0 0
  %1702 = vmatmul.mubr.bf16.gmra.mxu0 %v1667
  %v1703 = vpop.f32.mrf.mxu0
  %v1704 = vadd.f32 %v1649, %v1703
  %v1705 = vpop.f32.mrf.mxu0
  %v1706 = vpop.f32.mrf.mxu0
  %v1707 = vpop.f32.mrf.mxu0
  %1708 = vdwg.mxu0
  %1709 = vst [vmem:[%s13] sm:$0xff] %v1704
  // Predicated region
  $region54: #{lstm_predictor_forward.1} parent=0 // pred_check
    _
  $region55: #{lstm_predictor_forward.1} parent=0 // pred_check_branch
    %1711 = sbr.rel (0) target = $region57
  $region56: #{lstm_predictor_forward.1} parent=0 // pred_region
    _
  $region57: #{lstm_predictor_forward.1} parent=0 // pred_fallthru
    _
  // Predicated region
  $region58: #{lstm_predictor_forward.1} parent=0 // pred_check
    _
  $region59: #{lstm_predictor_forward.1} parent=0 // pred_check_branch
    %1713 = sbr.rel (0) target = $region61
  $region60: #{lstm_predictor_forward.1} parent=0 // pred_region
    _
  $region61: #{lstm_predictor_forward.1} parent=0 // pred_fallthru
    _
  // Predicated region
  $region62: #{lstm_predictor_forward.1} parent=0 // pred_check
    _
  $region63: #{lstm_predictor_forward.1} parent=0 // pred_check_branch
    %1715 = sbr.rel (0) target = $region65
  $region64: #{lstm_predictor_forward.1} parent=0 // pred_region
    _
  $region65: #{lstm_predictor_forward.1} parent=0 // pred_fallthru
    _
  // Predicated region
  $region66: #{lstm_predictor_forward.1} parent=0 // pred_check
    _
  $region67: #{lstm_predictor_forward.1} parent=0 // pred_check_branch
    %1717 = sbr.rel (0) target = $region69
  $region68: #{lstm_predictor_forward.1} parent=0 // pred_region
    _
  $region69: #{lstm_predictor_forward.1} parent=0 // pred_fallthru
    _
  // Predicated region
  $region70: #{lstm_predictor_forward.1} parent=0 // pred_check
    _
  $region71: #{lstm_predictor_forward.1} parent=0 // pred_check_branch
    %1719 = sbr.rel (0) target = $region73
  $region72: #{lstm_predictor_forward.1} parent=0 // pred_region
    _
  $region73: #{lstm_predictor_forward.1} parent=0 // pred_fallthru
    _
  // Predicated region
  $region74: #{lstm_predictor_forward.1} parent=0 // pred_check
    _
  $region75: #{lstm_predictor_forward.1} parent=0 // pred_check_branch
    %1721 = sbr.rel (0) target = $region77
  $region76: #{lstm_predictor_forward.1} parent=0 // pred_region
    _
  $region77: #{lstm_predictor_forward.1} parent=0 // pred_fallthru
    _

</llo_original>
